<compile_context>
chip_gen: v7x
topology: tpu7x:2x2x1
jax: 0.10.0
libtpu: 0.0.40
codegen_flags: <defaults>
</compile_context>

<pallas_src>
import jax
import jax.numpy as jnp
from jax import lax
from jax.experimental import pallas as pl
from jax.experimental.pallas import tpu as pltpu

DIMS = [2, 50, 50, 50, 50, 50, 1]
N_HIDDEN = len(DIMS) - 2          # 5 hidden (Linear+LayerNorm+Tanh) blocks
HID = 50
LN_EPS = 1e-5
INV_HID = 1.0 / HID


def _round_up(n, m):
    return ((n + m - 1) // m) * m


def _pinn_kernel(inp_ref, scale_ref, shift_ref, w0_ref, wh_ref, wl_ref,
                 bh_ref, bl_ref, g_ref, be_ref, o_ref):
    """Feature-major PINN forward on one lane-tile of collocation points.

    inp_ref : (2, T)        packed [x; t], T points on the lane axis
    scale/shift : (2, 1)    precomputed neural_net_scale affine
    w0_ref  : (50, 2)       first Linear (pre-transposed)
    wh_ref  : (4, 50, 50)   hidden Linears 1..4 (pre-transposed)
    wl_ref  : (1, 50)       final Linear (pre-transposed)
    bh/g/be : (5, 50, 1)    hidden biases / LayerNorm gamma / beta
    bl_ref  : (1, 1)        final bias
    o_ref   : (1, T)        uf, lane-dense
    """
    # neural_net_scale: -1 + 2*(H - lb)/(ub - lb)  ==  H*scale + shift
    h = inp_ref[...] * scale_ref[...] + shift_ref[...]            # (2, T)

    def ln_tanh(z, i):
        # Fused single-pass LayerNorm stats over the feature (sublane) axis.
        s1 = jnp.sum(z, axis=0, keepdims=True)                    # (1, T)  XLU
        s2 = jnp.sum(z * z, axis=0, keepdims=True)                 # (1, T)  XLU
        mu = s1 * INV_HID                                          # true 1/50
        var = s2 * INV_HID - mu * mu
        r = lax.rsqrt(var + LN_EPS)                                # EUP
        z = (z - mu) * r * g_ref[i] + be_ref[i]                    # VPU
        return jnp.tanh(z)                                         # EUP

    # Hidden block 0: Linear(2 -> 50) + LayerNorm + Tanh
    z = jnp.dot(w0_ref[...], h, preferred_element_type=jnp.float32) + bh_ref[0]
    h = ln_tanh(z, 0)

    # Hidden blocks 1..4: Linear(50 -> 50) + LayerNorm + Tanh (unrolled)
    for i in range(1, N_HIDDEN):
        z = jnp.dot(wh_ref[i - 1], h,
                    preferred_element_type=jnp.float32) + bh_ref[i]
        h = ln_tanh(z, i)

    # Final Linear(50 -> 1): (1,50) @ (50,T) -> (1,T), lane-dense store.
    o_ref[...] = (jnp.dot(wl_ref[...], h, preferred_element_type=jnp.float32)
                  + bl_ref[...])


def robust_pinn_forward(x, t, lb, ub, weights, biases, ln_gammas, ln_betas,
                        tile_n=2048):
    """x, t: (N, 1) f32; lb, ub: (1, 2); params in PyTorch layout.

    weights[i]: (d_in, d_out); biases[i]/gammas/betas: (1, d_out).
    Returns uf: (N, 1) float32.
    """
    N = x.shape[0]

    # ---- layout plumbing (wrapper-side, free) -----------------------------
    # Pack [x, t] and transpose so collocation points sit on the lane axis.
    H = jnp.concatenate([x, t], axis=1).T.astype(jnp.float32)    # (2, N)

    # Fold neural_net_scale into a single multiply-add.
    scale = (2.0 / (ub - lb)).T.astype(jnp.float32)              # (2, 1)
    shift = (-1.0 - 2.0 * lb / (ub - lb)).T.astype(jnp.float32)  # (2, 1)

    # Pre-transposed / stacked parameters (feature-major: h = W @ h).
    w0 = weights[0].T.astype(jnp.float32)                        # (50, 2)
    wh = jnp.stack([w.T for w in weights[1:N_HIDDEN]]).astype(jnp.float32)
    wl = weights[N_HIDDEN].T.astype(jnp.float32)                 # (1, 50)
    bh = jnp.stack([b.reshape(HID, 1) for b in biases[:N_HIDDEN]]
                   ).astype(jnp.float32)                         # (5, 50, 1)
    bl = biases[N_HIDDEN].reshape(1, 1).astype(jnp.float32)      # (1, 1)
    g = jnp.stack([p.reshape(HID, 1) for p in ln_gammas]).astype(jnp.float32)
    be = jnp.stack([p.reshape(HID, 1) for p in ln_betas]).astype(jnp.float32)

    # ---- tiling over N ----------------------------------------------------
    # Lane-tile of points; always a multiple of 128. tile_n = 2048 keeps
    # ~5 live (50, tile_n) f32 activations well under VMEM on all chips.
    tile_n = _round_up(max(128, min(tile_n, _round_up(N, 128))), 128)
    n_pad = pl.cdiv(N, tile_n) * tile_n
    if n_pad != N:
        H = jnp.pad(H, ((0, 0), (0, n_pad - N)))
    grid = (n_pad // tile_n,)

    const2 = lambda i: (0, 0)
    const3 = lambda i: (0, 0, 0)
    in_specs = [
        pl.BlockSpec((2, tile_n), lambda i: (0, i)),     # streamed input
        pl.BlockSpec((2, 1), const2),                    # scale   (resident)
        pl.BlockSpec((2, 1), const2),                    # shift   (resident)
        pl.BlockSpec((HID, 2), const2),                  # w0      (resident)
        pl.BlockSpec((N_HIDDEN - 1, HID, HID), const3),  # wh      (resident)
        pl.BlockSpec((1, HID), const2),                  # wl      (resident)
        pl.BlockSpec((N_HIDDEN, HID, 1), const3),        # biases  (resident)
        pl.BlockSpec((1, 1), const2),                    # final bias
        pl.BlockSpec((N_HIDDEN, HID, 1), const3),        # LN gamma
        pl.BlockSpec((N_HIDDEN, HID, 1), const3),        # LN beta
    ]
    out_spec = pl.BlockSpec((1, tile_n), lambda i: (0, i))

    out = pl.pallas_call(
        _pinn_kernel,
        out_shape=jax.ShapeDtypeStruct((1, n_pad), jnp.float32),
        grid=grid,
        in_specs=in_specs,
        out_specs=out_spec,
        compiler_params=pltpu.CompilerParams(
            dimension_semantics=("parallel",),           # shards TCs on v7x
            vmem_limit_bytes=48 * 1024 * 1024),
    )(H, scale, shift, w0, wh, wl, bh, bl, g, be)

    return out[:, :N].T                                          # (N, 1)


def robust_pinn_reference(x, t, lb, ub, weights, biases, gammas, betas):
    """Pure-JAX reference matching the PyTorch forward exactly (batch-major)."""
    H = jnp.concatenate([x, t], axis=1)
    h = -1.0 + 2.0 * (H - lb) / (ub - lb)
    for i in range(N_HIDDEN):
        h = h @ weights[i] + biases[i]
        mu = jnp.mean(h, axis=-1, keepdims=True)
        var = jnp.mean((h - mu) ** 2, axis=-1, keepdims=True)
        h = (h - mu) / jnp.sqrt(var + LN_EPS) * gammas[i] + betas[i]
        h = jnp.tanh(h)
    return h @ weights[N_HIDDEN] + biases[N_HIDDEN]


def init_params(key):
    """Deterministic xavier-uniform weights, bias=0.01, LayerNorm affine=ones/zeros."""
    weights, biases, gammas, betas = [], [], [], []
    for i in range(len(DIMS) - 1):
        d_in, d_out = DIMS[i], DIMS[i + 1]
        key, sub = jax.random.split(key)
        bound = (6.0 / (d_in + d_out)) ** 0.5
        w = jax.random.uniform(sub, (d_in, d_out), jnp.float32, -bound, bound)
        b = jnp.full((1, d_out), 0.01, jnp.float32)
        weights.append(w)
        biases.append(b)
        if i < N_HIDDEN:  # LayerNorm only on hidden layers
            gammas.append(jnp.ones((1, d_out), jnp.float32))
            betas.append(jnp.zeros((1, d_out), jnp.float32))
    return weights, biases, gammas, betas


if __name__ == "__main__":
    key = jax.random.PRNGKey(0)
    k_x, k_t, k_p = jax.random.split(key, 3)

    N = 384  # small shape; exercises a 3-step grid with tile_n=128
    x = jax.random.uniform(k_x, (N, 1), jnp.float32, -1.0, 1.0)
    t = jax.random.uniform(k_t, (N, 1), jnp.float32, 0.0, 1.0)

    # lb / ub as in the original script: per-input-dim bounds (scale=True)
    lb = jnp.array([[-1.0, 0.0]], dtype=jnp.float32)  # (1, 2)
    ub = jnp.array([[1.0, 1.0]], dtype=jnp.float32)   # (1, 2)

    weights, biases, gammas, betas = init_params(k_p)

    # NOTE: self.param0/self.param1 (PDE coefficients) are parameters of the
    # loss, not of forward(); forward() only evaluates the scaled MLP.
    # TODO(synk): gradients()/grads_dict() use torch.autograd (u_t, u_x, ...);
    # autodiff through the kernel is out of scope for this forward-pass kernel.

    uf = robust_pinn_forward(x, t, lb, ub, weights, biases, gammas, betas,
                             tile_n=128)
    jax.block_until_ready(uf)

    ref = robust_pinn_reference(x, t, lb, ub, weights, biases, gammas, betas)
    assert uf.shape == (N, 1) and uf.dtype == jnp.float32
    max_err = float(jnp.max(jnp.abs(uf - ref)))
    assert max_err < 1e-3, f"mismatch vs reference: {max_err}"
    print("KERNEL_OK")
</pallas_src>

<mosaic_0001>
module attributes {stable_mosaic.version = 11 : i64} {
  func.func @_pinn_kernel(%arg0: i32, %arg1: memref<2x128xf32, #tpu.memory_space<vmem>>, %arg2: memref<2x1xf32, #tpu.memory_space<vmem>>, %arg3: memref<2x1xf32, #tpu.memory_space<vmem>>, %arg4: memref<50x2xf32, #tpu.memory_space<vmem>>, %arg5: memref<4x50x50xf32, #tpu.memory_space<vmem>>, %arg6: memref<1x50xf32, #tpu.memory_space<vmem>>, %arg7: memref<5x50x1xf32, #tpu.memory_space<vmem>>, %arg8: memref<1x1xf32, #tpu.memory_space<vmem>>, %arg9: memref<5x50x1xf32, #tpu.memory_space<vmem>>, %arg10: memref<5x50x1xf32, #tpu.memory_space<vmem>>, %arg11: memref<1x128xf32, #tpu.memory_space<vmem>>) attributes {dimension_semantics = [#tpu.dimension_semantics<parallel>], iteration_bounds = array<i64: 3>, scalar_prefetch = 0 : i64, scratch_operands = 0 : i64, tpu.core_type = #tpu.core_type<tc>, window_params = [{transform_indices = @transform_0, window_bounds = array<i64: 2, 128>}, {pipeline_mode = #tpu.pipeline_mode<synchronous>, transform_indices = @transform_1, window_bounds = array<i64: 2, 1>}, {pipeline_mode = #tpu.pipeline_mode<synchronous>, transform_indices = @transform_2, window_bounds = array<i64: 2, 1>}, {pipeline_mode = #tpu.pipeline_mode<synchronous>, transform_indices = @transform_3, window_bounds = array<i64: 50, 2>}, {pipeline_mode = #tpu.pipeline_mode<synchronous>, transform_indices = @transform_4, window_bounds = array<i64: 4, 50, 50>}, {pipeline_mode = #tpu.pipeline_mode<synchronous>, transform_indices = @transform_5, window_bounds = array<i64: 1, 50>}, {pipeline_mode = #tpu.pipeline_mode<synchronous>, transform_indices = @transform_6, window_bounds = array<i64: 5, 50, 1>}, {pipeline_mode = #tpu.pipeline_mode<synchronous>, transform_indices = @transform_7, window_bounds = array<i64: 1, 1>}, {pipeline_mode = #tpu.pipeline_mode<synchronous>, transform_indices = @transform_8, window_bounds = array<i64: 5, 50, 1>}, {pipeline_mode = #tpu.pipeline_mode<synchronous>, transform_indices = @transform_9, window_bounds = array<i64: 5, 50, 1>}, {transform_indices = @transform_10, window_bounds = array<i64: 1, 128>}]} {
    %c0 = arith.constant 0 : index
    %c0_0 = arith.constant 0 : index
    %0 = vector.load %arg1[%c0, %c0_0] : memref<2x128xf32, #tpu.memory_space<vmem>>, vector<2x128xf32>
    %c0_1 = arith.constant 0 : index
    %c0_2 = arith.constant 0 : index
    %1 = vector.load %arg2[%c0_1, %c0_2] : memref<2x1xf32, #tpu.memory_space<vmem>>, vector<2x1xf32>
    %2 = vector.broadcast %1 : vector<2x1xf32> to vector<2x128xf32>
    %3 = arith.mulf %0, %2 : vector<2x128xf32>
    %c0_3 = arith.constant 0 : index
    %c0_4 = arith.constant 0 : index
    %4 = vector.load %arg3[%c0_3, %c0_4] : memref<2x1xf32, #tpu.memory_space<vmem>>, vector<2x1xf32>
    %5 = vector.broadcast %4 : vector<2x1xf32> to vector<2x128xf32>
    %6 = arith.addf %3, %5 : vector<2x128xf32>
    %c0_5 = arith.constant 0 : index
    %c0_6 = arith.constant 0 : index
    %7 = vector.load %arg4[%c0_5, %c0_6] : memref<50x2xf32, #tpu.memory_space<vmem>>, vector<50x2xf32>
    %cst = arith.constant dense<0.000000e+00> : vector<50x128xf32>
    %8 = tpu.matmul %7, %6, %cst {dimension_numbers = #tpu.dot_dimension_numbers<[1], [0], [0], [1], [0, 0, 1, 1], [], []>} : vector<50x2xf32>, vector<2x128xf32>, vector<50x128xf32> -> vector<50x128xf32>
    %c0_7 = arith.constant 0 : index
    %c0_8 = arith.constant 0 : index
    %c0_9 = arith.constant 0 : index
    %9 = vector.load %arg7[%c0_7, %c0_8, %c0_9] : memref<5x50x1xf32, #tpu.memory_space<vmem>>, vector<1x50x1xf32>
    %10 = vector.shape_cast %9 : vector<1x50x1xf32> to vector<50x1xf32>
    %11 = vector.broadcast %10 : vector<50x1xf32> to vector<50x128xf32>
    %12 = arith.addf %8, %11 : vector<50x128xf32>
    %cst_10 = arith.constant dense<0.000000e+00> : vector<128xf32>
    %13 = vector.multi_reduction <add>, %12, %cst_10 [0] : vector<50x128xf32> to vector<128xf32>
    %14 = vector.shape_cast %13 : vector<128xf32> to vector<1x128xf32>
    %15 = arith.mulf %12, %12 : vector<50x128xf32>
    %cst_11 = arith.constant dense<0.000000e+00> : vector<128xf32>
    %16 = vector.multi_reduction <add>, %15, %cst_11 [0] : vector<50x128xf32> to vector<128xf32>
    %17 = vector.shape_cast %16 : vector<128xf32> to vector<1x128xf32>
    %cst_12 = arith.constant 2.000000e-02 : f32
    %18 = vector.broadcast %cst_12 : f32 to vector<1x128xf32>
    %19 = arith.mulf %14, %18 : vector<1x128xf32>
    %cst_13 = arith.constant 2.000000e-02 : f32
    %20 = vector.broadcast %cst_13 : f32 to vector<1x128xf32>
    %21 = arith.mulf %17, %20 : vector<1x128xf32>
    %22 = arith.mulf %19, %19 : vector<1x128xf32>
    %23 = arith.subf %21, %22 : vector<1x128xf32>
    %cst_14 = arith.constant 9.99999974E-6 : f32
    %24 = vector.broadcast %cst_14 : f32 to vector<1x128xf32>
    %25 = arith.addf %23, %24 : vector<1x128xf32>
    %26 = math.rsqrt %25 : vector<1x128xf32>
    %27 = vector.broadcast %19 : vector<1x128xf32> to vector<50x128xf32>
    %28 = arith.subf %12, %27 : vector<50x128xf32>
    %29 = vector.broadcast %26 : vector<1x128xf32> to vector<50x128xf32>
    %30 = arith.mulf %28, %29 : vector<50x128xf32>
    %c0_15 = arith.constant 0 : index
    %c0_16 = arith.constant 0 : index
    %c0_17 = arith.constant 0 : index
    %31 = vector.load %arg9[%c0_15, %c0_16, %c0_17] : memref<5x50x1xf32, #tpu.memory_space<vmem>>, vector<1x50x1xf32>
    %32 = vector.shape_cast %31 : vector<1x50x1xf32> to vector<50x1xf32>
    %33 = vector.broadcast %32 : vector<50x1xf32> to vector<50x128xf32>
    %34 = arith.mulf %30, %33 : vector<50x128xf32>
    %c0_18 = arith.constant 0 : index
    %c0_19 = arith.constant 0 : index
    %c0_20 = arith.constant 0 : index
    %35 = vector.load %arg10[%c0_18, %c0_19, %c0_20] : memref<5x50x1xf32, #tpu.memory_space<vmem>>, vector<1x50x1xf32>
    %36 = vector.shape_cast %35 : vector<1x50x1xf32> to vector<50x1xf32>
    %37 = vector.broadcast %36 : vector<50x1xf32> to vector<50x128xf32>
    %38 = arith.addf %34, %37 : vector<50x128xf32>
    %39 = math.tanh %38 : vector<50x128xf32>
    %c0_21 = arith.constant 0 : index
    %c0_22 = arith.constant 0 : index
    %c0_23 = arith.constant 0 : index
    %40 = vector.load %arg5[%c0_21, %c0_22, %c0_23] : memref<4x50x50xf32, #tpu.memory_space<vmem>>, vector<1x50x50xf32>
    %41 = vector.shape_cast %40 : vector<1x50x50xf32> to vector<50x50xf32>
    %cst_24 = arith.constant dense<0.000000e+00> : vector<50x128xf32>
    %42 = tpu.matmul %41, %39, %cst_24 {dimension_numbers = #tpu.dot_dimension_numbers<[1], [0], [0], [1], [0, 0, 1, 1], [], []>} : vector<50x50xf32>, vector<50x128xf32>, vector<50x128xf32> -> vector<50x128xf32>
    %c1 = arith.constant 1 : index
    %c0_25 = arith.constant 0 : index
    %c0_26 = arith.constant 0 : index
    %43 = vector.load %arg7[%c1, %c0_25, %c0_26] : memref<5x50x1xf32, #tpu.memory_space<vmem>>, vector<1x50x1xf32>
    %44 = vector.shape_cast %43 : vector<1x50x1xf32> to vector<50x1xf32>
    %45 = vector.broadcast %44 : vector<50x1xf32> to vector<50x128xf32>
    %46 = arith.addf %42, %45 : vector<50x128xf32>
    %cst_27 = arith.constant dense<0.000000e+00> : vector<128xf32>
    %47 = vector.multi_reduction <add>, %46, %cst_27 [0] : vector<50x128xf32> to vector<128xf32>
    %48 = vector.shape_cast %47 : vector<128xf32> to vector<1x128xf32>
    %49 = arith.mulf %46, %46 : vector<50x128xf32>
    %cst_28 = arith.constant dense<0.000000e+00> : vector<128xf32>
    %50 = vector.multi_reduction <add>, %49, %cst_28 [0] : vector<50x128xf32> to vector<128xf32>
    %51 = vector.shape_cast %50 : vector<128xf32> to vector<1x128xf32>
    %cst_29 = arith.constant 2.000000e-02 : f32
    %52 = vector.broadcast %cst_29 : f32 to vector<1x128xf32>
    %53 = arith.mulf %48, %52 : vector<1x128xf32>
    %cst_30 = arith.constant 2.000000e-02 : f32
    %54 = vector.broadcast %cst_30 : f32 to vector<1x128xf32>
    %55 = arith.mulf %51, %54 : vector<1x128xf32>
    %56 = arith.mulf %53, %53 : vector<1x128xf32>
    %57 = arith.subf %55, %56 : vector<1x128xf32>
    %cst_31 = arith.constant 9.99999974E-6 : f32
    %58 = vector.broadcast %cst_31 : f32 to vector<1x128xf32>
    %59 = arith.addf %57, %58 : vector<1x128xf32>
    %60 = math.rsqrt %59 : vector<1x128xf32>
    %61 = vector.broadcast %53 : vector<1x128xf32> to vector<50x128xf32>
    %62 = arith.subf %46, %61 : vector<50x128xf32>
    %63 = vector.broadcast %60 : vector<1x128xf32> to vector<50x128xf32>
    %64 = arith.mulf %62, %63 : vector<50x128xf32>
    %c1_32 = arith.constant 1 : index
    %c0_33 = arith.constant 0 : index
    %c0_34 = arith.constant 0 : index
    %65 = vector.load %arg9[%c1_32, %c0_33, %c0_34] : memref<5x50x1xf32, #tpu.memory_space<vmem>>, vector<1x50x1xf32>
    %66 = vector.shape_cast %65 : vector<1x50x1xf32> to vector<50x1xf32>
    %67 = vector.broadcast %66 : vector<50x1xf32> to vector<50x128xf32>
    %68 = arith.mulf %64, %67 : vector<50x128xf32>
    %c1_35 = arith.constant 1 : index
    %c0_36 = arith.constant 0 : index
    %c0_37 = arith.constant 0 : index
    %69 = vector.load %arg10[%c1_35, %c0_36, %c0_37] : memref<5x50x1xf32, #tpu.memory_space<vmem>>, vector<1x50x1xf32>
    %70 = vector.shape_cast %69 : vector<1x50x1xf32> to vector<50x1xf32>
    %71 = vector.broadcast %70 : vector<50x1xf32> to vector<50x128xf32>
    %72 = arith.addf %68, %71 : vector<50x128xf32>
    %73 = math.tanh %72 : vector<50x128xf32>
    %c1_38 = arith.constant 1 : index
    %c0_39 = arith.constant 0 : index
    %c0_40 = arith.constant 0 : index
    %74 = vector.load %arg5[%c1_38, %c0_39, %c0_40] : memref<4x50x50xf32, #tpu.memory_space<vmem>>, vector<1x50x50xf32>
    %75 = vector.shape_cast %74 : vector<1x50x50xf32> to vector<50x50xf32>
    %cst_41 = arith.constant dense<0.000000e+00> : vector<50x128xf32>
    %76 = tpu.matmul %75, %73, %cst_41 {dimension_numbers = #tpu.dot_dimension_numbers<[1], [0], [0], [1], [0, 0, 1, 1], [], []>} : vector<50x50xf32>, vector<50x128xf32>, vector<50x128xf32> -> vector<50x128xf32>
    %c2 = arith.constant 2 : index
    %c0_42 = arith.constant 0 : index
    %c0_43 = arith.constant 0 : index
    %77 = vector.load %arg7[%c2, %c0_42, %c0_43] : memref<5x50x1xf32, #tpu.memory_space<vmem>>, vector<1x50x1xf32>
    %78 = vector.shape_cast %77 : vector<1x50x1xf32> to vector<50x1xf32>
    %79 = vector.broadcast %78 : vector<50x1xf32> to vector<50x128xf32>
    %80 = arith.addf %76, %79 : vector<50x128xf32>
    %cst_44 = arith.constant dense<0.000000e+00> : vector<128xf32>
    %81 = vector.multi_reduction <add>, %80, %cst_44 [0] : vector<50x128xf32> to vector<128xf32>
    %82 = vector.shape_cast %81 : vector<128xf32> to vector<1x128xf32>
    %83 = arith.mulf %80, %80 : vector<50x128xf32>
    %cst_45 = arith.constant dense<0.000000e+00> : vector<128xf32>
    %84 = vector.multi_reduction <add>, %83, %cst_45 [0] : vector<50x128xf32> to vector<128xf32>
    %85 = vector.shape_cast %84 : vector<128xf32> to vector<1x128xf32>
    %cst_46 = arith.constant 2.000000e-02 : f32
    %86 = vector.broadcast %cst_46 : f32 to vector<1x128xf32>
    %87 = arith.mulf %82, %86 : vector<1x128xf32>
    %cst_47 = arith.constant 2.000000e-02 : f32
    %88 = vector.broadcast %cst_47 : f32 to vector<1x128xf32>
    %89 = arith.mulf %85, %88 : vector<1x128xf32>
    %90 = arith.mulf %87, %87 : vector<1x128xf32>
    %91 = arith.subf %89, %90 : vector<1x128xf32>
    %cst_48 = arith.constant 9.99999974E-6 : f32
    %92 = vector.broadcast %cst_48 : f32 to vector<1x128xf32>
    %93 = arith.addf %91, %92 : vector<1x128xf32>
    %94 = math.rsqrt %93 : vector<1x128xf32>
    %95 = vector.broadcast %87 : vector<1x128xf32> to vector<50x128xf32>
    %96 = arith.subf %80, %95 : vector<50x128xf32>
    %97 = vector.broadcast %94 : vector<1x128xf32> to vector<50x128xf32>
    %98 = arith.mulf %96, %97 : vector<50x128xf32>
    %c2_49 = arith.constant 2 : index
    %c0_50 = arith.constant 0 : index
    %c0_51 = arith.constant 0 : index
    %99 = vector.load %arg9[%c2_49, %c0_50, %c0_51] : memref<5x50x1xf32, #tpu.memory_space<vmem>>, vector<1x50x1xf32>
    %100 = vector.shape_cast %99 : vector<1x50x1xf32> to vector<50x1xf32>
    %101 = vector.broadcast %100 : vector<50x1xf32> to vector<50x128xf32>
    %102 = arith.mulf %98, %101 : vector<50x128xf32>
    %c2_52 = arith.constant 2 : index
    %c0_53 = arith.constant 0 : index
    %c0_54 = arith.constant 0 : index
    %103 = vector.load %arg10[%c2_52, %c0_53, %c0_54] : memref<5x50x1xf32, #tpu.memory_space<vmem>>, vector<1x50x1xf32>
    %104 = vector.shape_cast %103 : vector<1x50x1xf32> to vector<50x1xf32>
    %105 = vector.broadcast %104 : vector<50x1xf32> to vector<50x128xf32>
    %106 = arith.addf %102, %105 : vector<50x128xf32>
    %107 = math.tanh %106 : vector<50x128xf32>
    %c2_55 = arith.constant 2 : index
    %c0_56 = arith.constant 0 : index
    %c0_57 = arith.constant 0 : index
    %108 = vector.load %arg5[%c2_55, %c0_56, %c0_57] : memref<4x50x50xf32, #tpu.memory_space<vmem>>, vector<1x50x50xf32>
    %109 = vector.shape_cast %108 : vector<1x50x50xf32> to vector<50x50xf32>
    %cst_58 = arith.constant dense<0.000000e+00> : vector<50x128xf32>
    %110 = tpu.matmul %109, %107, %cst_58 {dimension_numbers = #tpu.dot_dimension_numbers<[1], [0], [0], [1], [0, 0, 1, 1], [], []>} : vector<50x50xf32>, vector<50x128xf32>, vector<50x128xf32> -> vector<50x128xf32>
    %c3 = arith.constant 3 : index
    %c0_59 = arith.constant 0 : index
    %c0_60 = arith.constant 0 : index
    %111 = vector.load %arg7[%c3, %c0_59, %c0_60] : memref<5x50x1xf32, #tpu.memory_space<vmem>>, vector<1x50x1xf32>
    %112 = vector.shape_cast %111 : vector<1x50x1xf32> to vector<50x1xf32>
    %113 = vector.broadcast %112 : vector<50x1xf32> to vector<50x128xf32>
    %114 = arith.addf %110, %113 : vector<50x128xf32>
    %cst_61 = arith.constant dense<0.000000e+00> : vector<128xf32>
    %115 = vector.multi_reduction <add>, %114, %cst_61 [0] : vector<50x128xf32> to vector<128xf32>
    %116 = vector.shape_cast %115 : vector<128xf32> to vector<1x128xf32>
    %117 = arith.mulf %114, %114 : vector<50x128xf32>
    %cst_62 = arith.constant dense<0.000000e+00> : vector<128xf32>
    %118 = vector.multi_reduction <add>, %117, %cst_62 [0] : vector<50x128xf32> to vector<128xf32>
    %119 = vector.shape_cast %118 : vector<128xf32> to vector<1x128xf32>
    %cst_63 = arith.constant 2.000000e-02 : f32
    %120 = vector.broadcast %cst_63 : f32 to vector<1x128xf32>
    %121 = arith.mulf %116, %120 : vector<1x128xf32>
    %cst_64 = arith.constant 2.000000e-02 : f32
    %122 = vector.broadcast %cst_64 : f32 to vector<1x128xf32>
    %123 = arith.mulf %119, %122 : vector<1x128xf32>
    %124 = arith.mulf %121, %121 : vector<1x128xf32>
    %125 = arith.subf %123, %124 : vector<1x128xf32>
    %cst_65 = arith.constant 9.99999974E-6 : f32
    %126 = vector.broadcast %cst_65 : f32 to vector<1x128xf32>
    %127 = arith.addf %125, %126 : vector<1x128xf32>
    %128 = math.rsqrt %127 : vector<1x128xf32>
    %129 = vector.broadcast %121 : vector<1x128xf32> to vector<50x128xf32>
    %130 = arith.subf %114, %129 : vector<50x128xf32>
    %131 = vector.broadcast %128 : vector<1x128xf32> to vector<50x128xf32>
    %132 = arith.mulf %130, %131 : vector<50x128xf32>
    %c3_66 = arith.constant 3 : index
    %c0_67 = arith.constant 0 : index
    %c0_68 = arith.constant 0 : index
    %133 = vector.load %arg9[%c3_66, %c0_67, %c0_68] : memref<5x50x1xf32, #tpu.memory_space<vmem>>, vector<1x50x1xf32>
    %134 = vector.shape_cast %133 : vector<1x50x1xf32> to vector<50x1xf32>
    %135 = vector.broadcast %134 : vector<50x1xf32> to vector<50x128xf32>
    %136 = arith.mulf %132, %135 : vector<50x128xf32>
    %c3_69 = arith.constant 3 : index
    %c0_70 = arith.constant 0 : index
    %c0_71 = arith.constant 0 : index
    %137 = vector.load %arg10[%c3_69, %c0_70, %c0_71] : memref<5x50x1xf32, #tpu.memory_space<vmem>>, vector<1x50x1xf32>
    %138 = vector.shape_cast %137 : vector<1x50x1xf32> to vector<50x1xf32>
    %139 = vector.broadcast %138 : vector<50x1xf32> to vector<50x128xf32>
    %140 = arith.addf %136, %139 : vector<50x128xf32>
    %141 = math.tanh %140 : vector<50x128xf32>
    %c3_72 = arith.constant 3 : index
    %c0_73 = arith.constant 0 : index
    %c0_74 = arith.constant 0 : index
    %142 = vector.load %arg5[%c3_72, %c0_73, %c0_74] : memref<4x50x50xf32, #tpu.memory_space<vmem>>, vector<1x50x50xf32>
    %143 = vector.shape_cast %142 : vector<1x50x50xf32> to vector<50x50xf32>
    %cst_75 = arith.constant dense<0.000000e+00> : vector<50x128xf32>
    %144 = tpu.matmul %143, %141, %cst_75 {dimension_numbers = #tpu.dot_dimension_numbers<[1], [0], [0], [1], [0, 0, 1, 1], [], []>} : vector<50x50xf32>, vector<50x128xf32>, vector<50x128xf32> -> vector<50x128xf32>
    %c4 = arith.constant 4 : index
    %c0_76 = arith.constant 0 : index
    %c0_77 = arith.constant 0 : index
    %145 = vector.load %arg7[%c4, %c0_76, %c0_77] : memref<5x50x1xf32, #tpu.memory_space<vmem>>, vector<1x50x1xf32>
    %146 = vector.shape_cast %145 : vector<1x50x1xf32> to vector<50x1xf32>
    %147 = vector.broadcast %146 : vector<50x1xf32> to vector<50x128xf32>
    %148 = arith.addf %144, %147 : vector<50x128xf32>
    %cst_78 = arith.constant dense<0.000000e+00> : vector<128xf32>
    %149 = vector.multi_reduction <add>, %148, %cst_78 [0] : vector<50x128xf32> to vector<128xf32>
    %150 = vector.shape_cast %149 : vector<128xf32> to vector<1x128xf32>
    %151 = arith.mulf %148, %148 : vector<50x128xf32>
    %cst_79 = arith.constant dense<0.000000e+00> : vector<128xf32>
    %152 = vector.multi_reduction <add>, %151, %cst_79 [0] : vector<50x128xf32> to vector<128xf32>
    %153 = vector.shape_cast %152 : vector<128xf32> to vector<1x128xf32>
    %cst_80 = arith.constant 2.000000e-02 : f32
    %154 = vector.broadcast %cst_80 : f32 to vector<1x128xf32>
    %155 = arith.mulf %150, %154 : vector<1x128xf32>
    %cst_81 = arith.constant 2.000000e-02 : f32
    %156 = vector.broadcast %cst_81 : f32 to vector<1x128xf32>
    %157 = arith.mulf %153, %156 : vector<1x128xf32>
    %158 = arith.mulf %155, %155 : vector<1x128xf32>
    %159 = arith.subf %157, %158 : vector<1x128xf32>
    %cst_82 = arith.constant 9.99999974E-6 : f32
    %160 = vector.broadcast %cst_82 : f32 to vector<1x128xf32>
    %161 = arith.addf %159, %160 : vector<1x128xf32>
    %162 = math.rsqrt %161 : vector<1x128xf32>
    %163 = vector.broadcast %155 : vector<1x128xf32> to vector<50x128xf32>
    %164 = arith.subf %148, %163 : vector<50x128xf32>
    %165 = vector.broadcast %162 : vector<1x128xf32> to vector<50x128xf32>
    %166 = arith.mulf %164, %165 : vector<50x128xf32>
    %c4_83 = arith.constant 4 : index
    %c0_84 = arith.constant 0 : index
    %c0_85 = arith.constant 0 : index
    %167 = vector.load %arg9[%c4_83, %c0_84, %c0_85] : memref<5x50x1xf32, #tpu.memory_space<vmem>>, vector<1x50x1xf32>
    %168 = vector.shape_cast %167 : vector<1x50x1xf32> to vector<50x1xf32>
    %169 = vector.broadcast %168 : vector<50x1xf32> to vector<50x128xf32>
    %170 = arith.mulf %166, %169 : vector<50x128xf32>
    %c4_86 = arith.constant 4 : index
    %c0_87 = arith.constant 0 : index
    %c0_88 = arith.constant 0 : index
    %171 = vector.load %arg10[%c4_86, %c0_87, %c0_88] : memref<5x50x1xf32, #tpu.memory_space<vmem>>, vector<1x50x1xf32>
    %172 = vector.shape_cast %171 : vector<1x50x1xf32> to vector<50x1xf32>
    %173 = vector.broadcast %172 : vector<50x1xf32> to vector<50x128xf32>
    %174 = arith.addf %170, %173 : vector<50x128xf32>
    %175 = math.tanh %174 : vector<50x128xf32>
    %c0_89 = arith.constant 0 : index
    %c0_90 = arith.constant 0 : index
    %176 = vector.load %arg6[%c0_89, %c0_90] : memref<1x50xf32, #tpu.memory_space<vmem>>, vector<1x50xf32>
    %cst_91 = arith.constant dense<0.000000e+00> : vector<1x128xf32>
    %177 = tpu.matmul %176, %175, %cst_91 {dimension_numbers = #tpu.dot_dimension_numbers<[1], [0], [0], [1], [0, 0, 1, 1], [], []>} : vector<1x50xf32>, vector<50x128xf32>, vector<1x128xf32> -> vector<1x128xf32>
    %c0_92 = arith.constant 0 : index
    %c0_93 = arith.constant 0 : index
    %178 = vector.load %arg8[%c0_92, %c0_93] : memref<1x1xf32, #tpu.memory_space<vmem>>, vector<1x1xf32>
    %179 = vector.broadcast %178 : vector<1x1xf32> to vector<1x128xf32>
    %180 = arith.addf %177, %179 : vector<1x128xf32>
    %c0_94 = arith.constant 0 : index
    %c0_95 = arith.constant 0 : index
    %181 = vector.load %arg11[%c0_94, %c0_95] : memref<1x128xf32, #tpu.memory_space<vmem>>, vector<1x128xf32>
    tpu.vector_store %arg11[%c0_94, %c0_95], %180 {strides = array<i32>} : memref<1x128xf32, #tpu.memory_space<vmem>>, vector<1x128xf32>,
    return
  }
  func.func @transform_0(%arg0: i32) -> (i32, i32) {
    %c0_i32 = arith.constant 0 : i32
    %c0_i32_0 = arith.constant 0 : i32
    return %c0_i32, %arg0 : i32, i32
  }
  func.func @transform_1(%arg0: i32) -> (i32, i32) {
    %c0_i32 = arith.constant 0 : i32
    %c0_i32_0 = arith.constant 0 : i32
    %c0_i32_1 = arith.constant 0 : i32
    return %c0_i32, %c0_i32_0 : i32, i32
  }
  func.func @transform_2(%arg0: i32) -> (i32, i32) {
    %c0_i32 = arith.constant 0 : i32
    %c0_i32_0 = arith.constant 0 : i32
    %c0_i32_1 = arith.constant 0 : i32
    return %c0_i32, %c0_i32_0 : i32, i32
  }
  func.func @transform_3(%arg0: i32) -> (i32, i32) {
    %c0_i32 = arith.constant 0 : i32
    %c0_i32_0 = arith.constant 0 : i32
    %c0_i32_1 = arith.constant 0 : i32
    return %c0_i32, %c0_i32_0 : i32, i32
  }
  func.func @transform_4(%arg0: i32) -> (i32, i32, i32) {
    %c0_i32 = arith.constant 0 : i32
    %c0_i32_0 = arith.constant 0 : i32
    %c0_i32_1 = arith.constant 0 : i32
    %c0_i32_2 = arith.constant 0 : i32
    return %c0_i32, %c0_i32_0, %c0_i32_1 : i32, i32, i32
  }
  func.func @transform_5(%arg0: i32) -> (i32, i32) {
    %c0_i32 = arith.constant 0 : i32
    %c0_i32_0 = arith.constant 0 : i32
    %c0_i32_1 = arith.constant 0 : i32
    return %c0_i32, %c0_i32_0 : i32, i32
  }
  func.func @transform_6(%arg0: i32) -> (i32, i32, i32) {
    %c0_i32 = arith.constant 0 : i32
    %c0_i32_0 = arith.constant 0 : i32
    %c0_i32_1 = arith.constant 0 : i32
    %c0_i32_2 = arith.constant 0 : i32
    return %c0_i32, %c0_i32_0, %c0_i32_1 : i32, i32, i32
  }
  func.func @transform_7(%arg0: i32) -> (i32, i32) {
    %c0_i32 = arith.constant 0 : i32
    %c0_i32_0 = arith.constant 0 : i32
    %c0_i32_1 = arith.constant 0 : i32
    return %c0_i32, %c0_i32_0 : i32, i32
  }
  func.func @transform_8(%arg0: i32) -> (i32, i32, i32) {
    %c0_i32 = arith.constant 0 : i32
    %c0_i32_0 = arith.constant 0 : i32
    %c0_i32_1 = arith.constant 0 : i32
    %c0_i32_2 = arith.constant 0 : i32
    return %c0_i32, %c0_i32_0, %c0_i32_1 : i32, i32, i32
  }
  func.func @transform_9(%arg0: i32) -> (i32, i32, i32) {
    %c0_i32 = arith.constant 0 : i32
    %c0_i32_0 = arith.constant 0 : i32
    %c0_i32_1 = arith.constant 0 : i32
    %c0_i32_2 = arith.constant 0 : i32
    return %c0_i32, %c0_i32_0, %c0_i32_1 : i32, i32, i32
  }
  func.func @transform_10(%arg0: i32) -> (i32, i32) {
    %c0_i32 = arith.constant 0 : i32
    %c0_i32_0 = arith.constant 0 : i32
    return %c0_i32, %arg0 : i32, i32
  }
}

</mosaic_0001>

<llo_original>
// kernel: tpu_custom_call.1
$region0: #{tpu_custom_call.1}
  #allocation0 [shape = 'u32[]', space=smem, size = 0x4, offset = 0x4, fixed_abs, tag = 'smem constant byte address 0x4 - core index']
  #allocation1 [shape = 'u32[144,128]{1,0:T(1,128)}', space=vmem, size = 0x12000, scoped, tag = 'internal scratch']
  #allocation2 [shape = 'f32[1,1]{1,0:T(1,128)S(1)}', space=vmem, size = 0x200, scoped, tag = 'scoped memory for tpu_custom_call.1']
  %s0 = inlined_call_operand.vmem [shape: f32[2,384], index: 0, kind: input, shape index: {}]
  %s1 = inlined_call_operand.vmem [shape: f32[2,1], index: 1, kind: input, shape index: {}]
  %s2 = inlined_call_operand.vmem [shape: f32[2,1], index: 2, kind: input, shape index: {}]
  %s3 = inlined_call_operand.vmem [shape: f32[50,2], index: 3, kind: input, shape index: {}]
  %s4 = inlined_call_operand.vmem [shape: f32[4,50,50], index: 4, kind: input, shape index: {}]
  %s5 = inlined_call_operand.vmem [shape: f32[1,50], index: 5, kind: input, shape index: {}]
  %s6 = inlined_call_operand.vmem [shape: f32[5,50,1], index: 6, kind: input, shape index: {}]
  %s7 = inlined_call_operand.<no memory space> [shape: f32[1,1], index: 7, kind: input, shape index: {}]
  %s8 = inlined_call_operand.vmem [shape: f32[5,50,1], index: 8, kind: input, shape index: {}]
  %s9 = inlined_call_operand.vmem [shape: f32[5,50,1], index: 9, kind: input, shape index: {}]
  %s10 = inlined_call_operand.hbm [shape: f32[1,384], index: 10, kind: output, shape index: {}]
  %s11 = sld [smem:[#allocation0]]
  $region73: #{tpu_custom_call.1} parent=0
    _
  %s13 = ssub.s32 1, %s11
  %s14 = scalar_select 0, %s13, %s11
  %v15 = vstv %s7
  %16 = vst [vmem:[#allocation2] sm:$0x1] %v15
  $region1: #{tpu_custom_call.1} parent=0
    #allocation3 [shape = 'u8[1024]{0}', space=vmem, size = 0x400, scoped, tag = 'output window, operand 0']
    #allocation4 [shape = 's32[2]{0}', space=sflag, size = 0x8, scoped, tag = 'scoped memory for tpu_custom_call.1']
    %17 = vsyncpa [#allocation4], 0
    %s18 = scalar_lea.sflag [#allocation4], 1
    %19 = vsyncpa %s18, 0
    loop: start=0, step=1, limit=5
    $region2: #{tpu_custom_call.1} parent=1 // loop_pre_header
      _
    $region3: #{tpu_custom_call.1} parent=1 // loop_header
      %s21 = sphi 0, %s25
      %p22 = scmp.ge.s32.totalorder %s21, 5
      %s31 = sphi 0, %s33
      %s34 = sphi 0, %s31
      %s35 = sphi 0, %s34
      %s51 = sphi 0, %s35
      %s55 = sphi 0, %s55
      %s57 = sphi 0, %s55
      %s58 = sphi 0, %s57
      %s72 = sphi 0, %s58
      %s76 = sphi 0, %s76
      %s78 = sphi 0, %s76
      %s79 = sphi 0, %s78
      %s93 = sphi 0, %s79
      %s97 = sphi 0, %s97
      %s99 = sphi 0, %s97
      %s100 = sphi 0, %s99
      %s114 = sphi 0, %s100
      %s118 = sphi 0, %s118
      %s120 = sphi 0, %s118
      %s121 = sphi 0, %s120
      %s135 = sphi 0, %s121
      %s139 = sphi 0, %s139
      %s141 = sphi 0, %s139
      %s142 = sphi 0, %s141
      %s156 = sphi 0, %s142
      %s160 = sphi 0, %s160
      %s162 = sphi 0, %s160
      %s163 = sphi 0, %s162
      %s177 = sphi 0, %s163
      %s181 = sphi 0, %s181
      %s183 = sphi 0, %s181
      %s184 = sphi 0, %s183
      %s198 = sphi 0, %s184
      %s202 = sphi 0, %s202
      %s204 = sphi 0, %s202
      %s205 = sphi 0, %s204
      %s219 = sphi 0, %s205
      %s223 = sphi 0, %s223
      %s225 = sphi 0, %s223
      %s226 = sphi 0, %s225
      %s240 = sphi 0, %s226
      %s246 = sphi 0, %s248
      %s249 = sphi 0, %s246
      %s250 = sphi 0, %s249
      %s266 = sphi 0, %s250
    $region4: #{tpu_custom_call.1} parent=1 // loop_header_branch
      %24 = sbr.rel (%p22) target = $region8
    $region5: #{tpu_custom_call.1} parent=1 // loop_body
      %s26 = ssub.s32 %s21, 1
      %s27 = ssub.s32 %s21, 2
      %s28 = sadd.s32 %s21, 1
      %s29 = ssub.s32 %s21, %s28
      %p30 = scmp.eq.s32.totalorder %s29, 0
      %s32 = sadd.s32 %s31, 1
      %s33 = scalar_select %p30, %s31, %s32
      %p36 = pneg %p30
      %p37 = scmp.eq.s32.totalorder %s21, 2
      %p38 = por %p36, %p37
      %p39 = scmp.ne.s32.totalorder %s31, %s34
      %p40 = scmp.eq.s32.totalorder %s21, 0
      %p41 = por %p39, %p40
      %p42 = scmp.ne.s32.totalorder %s31, %s34
      %p43 = scmp.eq.s32.totalorder %s26, 2
      %p44 = por %p42, %p43
      %p45 = scmp.ne.s32.totalorder %s34, %s35
      %p46 = scmp.eq.s32.totalorder %s26, 0
      %p47 = por %p45, %p46
      %p48 = scmp.ne.s32.totalorder %s34, %s35
      %p49 = scmp.eq.s32.totalorder %s27, 2
      %p50 = por %p48, %p49
      %p52 = scmp.ne.s32.totalorder %s35, %s51
      %p53 = scmp.eq.s32.totalorder %s27, 0
      %p54 = por %p52, %p53
      %s56 = sadd.s32 %s55, 1
      %p59 = scmp.eq.s32.totalorder %s21, 2
      %p60 = scmp.ne.s32.totalorder %s55, %s57
      %p61 = scmp.eq.s32.totalorder %s21, 0
      %p62 = por %p60, %p61
      %p63 = scmp.ne.s32.totalorder %s55, %s57
      %p64 = scmp.eq.s32.totalorder %s26, 2
      %p65 = por %p63, %p64
      %p66 = scmp.ne.s32.totalorder %s57, %s58
      %p67 = scmp.eq.s32.totalorder %s26, 0
      %p68 = por %p66, %p67
      %p69 = scmp.ne.s32.totalorder %s57, %s58
      %p70 = scmp.eq.s32.totalorder %s27, 2
      %p71 = por %p69, %p70
      %p73 = scmp.ne.s32.totalorder %s58, %s72
      %p74 = scmp.eq.s32.totalorder %s27, 0
      %p75 = por %p73, %p74
      %s77 = sadd.s32 %s76, 1
      %p80 = scmp.eq.s32.totalorder %s21, 2
      %p81 = scmp.ne.s32.totalorder %s76, %s78
      %p82 = scmp.eq.s32.totalorder %s21, 0
      %p83 = por %p81, %p82
      %p84 = scmp.ne.s32.totalorder %s76, %s78
      %p85 = scmp.eq.s32.totalorder %s26, 2
      %p86 = por %p84, %p85
      %p87 = scmp.ne.s32.totalorder %s78, %s79
      %p88 = scmp.eq.s32.totalorder %s26, 0
      %p89 = por %p87, %p88
      %p90 = scmp.ne.s32.totalorder %s78, %s79
      %p91 = scmp.eq.s32.totalorder %s27, 2
      %p92 = por %p90, %p91
      %p94 = scmp.ne.s32.totalorder %s79, %s93
      %p95 = scmp.eq.s32.totalorder %s27, 0
      %p96 = por %p94, %p95
      %s98 = sadd.s32 %s97, 1
      %p101 = scmp.eq.s32.totalorder %s21, 2
      %p102 = scmp.ne.s32.totalorder %s97, %s99
      %p103 = scmp.eq.s32.totalorder %s21, 0
      %p104 = por %p102, %p103
      %p105 = scmp.ne.s32.totalorder %s97, %s99
      %p106 = scmp.eq.s32.totalorder %s26, 2
      %p107 = por %p105, %p106
      %p108 = scmp.ne.s32.totalorder %s99, %s100
      %p109 = scmp.eq.s32.totalorder %s26, 0
      %p110 = por %p108, %p109
      %p111 = scmp.ne.s32.totalorder %s99, %s100
      %p112 = scmp.eq.s32.totalorder %s27, 2
      %p113 = por %p111, %p112
      %p115 = scmp.ne.s32.totalorder %s100, %s114
      %p116 = scmp.eq.s32.totalorder %s27, 0
      %p117 = por %p115, %p116
      %s119 = sadd.s32 %s118, 1
      %p122 = scmp.eq.s32.totalorder %s21, 2
      %p123 = scmp.ne.s32.totalorder %s118, %s120
      %p124 = scmp.eq.s32.totalorder %s21, 0
      %p125 = por %p123, %p124
      %p126 = scmp.ne.s32.totalorder %s118, %s120
      %p127 = scmp.eq.s32.totalorder %s26, 2
      %p128 = por %p126, %p127
      %p129 = scmp.ne.s32.totalorder %s120, %s121
      %p130 = scmp.eq.s32.totalorder %s26, 0
      %p131 = por %p129, %p130
      %p132 = scmp.ne.s32.totalorder %s120, %s121
      %p133 = scmp.eq.s32.totalorder %s27, 2
      %p134 = por %p132, %p133
      %p136 = scmp.ne.s32.totalorder %s121, %s135
      %p137 = scmp.eq.s32.totalorder %s27, 0
      %p138 = por %p136, %p137
      %s140 = sadd.s32 %s139, 1
      %p143 = scmp.eq.s32.totalorder %s21, 2
      %p144 = scmp.ne.s32.totalorder %s139, %s141
      %p145 = scmp.eq.s32.totalorder %s21, 0
      %p146 = por %p144, %p145
      %p147 = scmp.ne.s32.totalorder %s139, %s141
      %p148 = scmp.eq.s32.totalorder %s26, 2
      %p149 = por %p147, %p148
      %p150 = scmp.ne.s32.totalorder %s141, %s142
      %p151 = scmp.eq.s32.totalorder %s26, 0
      %p152 = por %p150, %p151
      %p153 = scmp.ne.s32.totalorder %s141, %s142
      %p154 = scmp.eq.s32.totalorder %s27, 2
      %p155 = por %p153, %p154
      %p157 = scmp.ne.s32.totalorder %s142, %s156
      %p158 = scmp.eq.s32.totalorder %s27, 0
      %p159 = por %p157, %p158
      %s161 = sadd.s32 %s160, 1
      %p164 = scmp.eq.s32.totalorder %s21, 2
      %p165 = scmp.ne.s32.totalorder %s160, %s162
      %p166 = scmp.eq.s32.totalorder %s21, 0
      %p167 = por %p165, %p166
      %p168 = scmp.ne.s32.totalorder %s160, %s162
      %p169 = scmp.eq.s32.totalorder %s26, 2
      %p170 = por %p168, %p169
      %p171 = scmp.ne.s32.totalorder %s162, %s163
      %p172 = scmp.eq.s32.totalorder %s26, 0
      %p173 = por %p171, %p172
      %p174 = scmp.ne.s32.totalorder %s162, %s163
      %p175 = scmp.eq.s32.totalorder %s27, 2
      %p176 = por %p174, %p175
      %p178 = scmp.ne.s32.totalorder %s163, %s177
      %p179 = scmp.eq.s32.totalorder %s27, 0
      %p180 = por %p178, %p179
      %s182 = sadd.s32 %s181, 1
      %p185 = scmp.eq.s32.totalorder %s21, 2
      %p186 = scmp.ne.s32.totalorder %s181, %s183
      %p187 = scmp.eq.s32.totalorder %s21, 0
      %p188 = por %p186, %p187
      %p189 = scmp.ne.s32.totalorder %s181, %s183
      %p190 = scmp.eq.s32.totalorder %s26, 2
      %p191 = por %p189, %p190
      %p192 = scmp.ne.s32.totalorder %s183, %s184
      %p193 = scmp.eq.s32.totalorder %s26, 0
      %p194 = por %p192, %p193
      %p195 = scmp.ne.s32.totalorder %s183, %s184
      %p196 = scmp.eq.s32.totalorder %s27, 2
      %p197 = por %p195, %p196
      %p199 = scmp.ne.s32.totalorder %s184, %s198
      %p200 = scmp.eq.s32.totalorder %s27, 0
      %p201 = por %p199, %p200
      %s203 = sadd.s32 %s202, 1
      %p206 = scmp.eq.s32.totalorder %s21, 2
      %p207 = scmp.ne.s32.totalorder %s202, %s204
      %p208 = scmp.eq.s32.totalorder %s21, 0
      %p209 = por %p207, %p208
      %p210 = scmp.ne.s32.totalorder %s202, %s204
      %p211 = scmp.eq.s32.totalorder %s26, 2
      %p212 = por %p210, %p211
      %p213 = scmp.ne.s32.totalorder %s204, %s205
      %p214 = scmp.eq.s32.totalorder %s26, 0
      %p215 = por %p213, %p214
      %p216 = scmp.ne.s32.totalorder %s204, %s205
      %p217 = scmp.eq.s32.totalorder %s27, 2
      %p218 = por %p216, %p217
      %p220 = scmp.ne.s32.totalorder %s205, %s219
      %p221 = scmp.eq.s32.totalorder %s27, 0
      %p222 = por %p220, %p221
      %s224 = sadd.s32 %s223, 1
      %p227 = scmp.eq.s32.totalorder %s21, 2
      %p228 = scmp.ne.s32.totalorder %s223, %s225
      %p229 = scmp.eq.s32.totalorder %s21, 0
      %p230 = por %p228, %p229
      %p231 = scmp.ne.s32.totalorder %s223, %s225
      %p232 = scmp.eq.s32.totalorder %s26, 2
      %p233 = por %p231, %p232
      %p234 = scmp.ne.s32.totalorder %s225, %s226
      %p235 = scmp.eq.s32.totalorder %s26, 0
      %p236 = por %p234, %p235
      %p237 = scmp.ne.s32.totalorder %s225, %s226
      %p238 = scmp.eq.s32.totalorder %s27, 2
      %p239 = por %p237, %p238
      %p241 = scmp.ne.s32.totalorder %s226, %s240
      %p242 = scmp.eq.s32.totalorder %s27, 0
      %p243 = por %p241, %p242
      %s244 = ssub.s32 %s21, %s28
      %p245 = scmp.eq.s32.totalorder %s244, 0
      %s247 = sadd.s32 %s246, 1
      %s248 = scalar_select %p245, %s246, %s247
      %p251 = pneg %p245
      %p252 = scmp.eq.s32.totalorder %s21, 2
      %p253 = por %p251, %p252
      %p254 = scmp.ne.s32.totalorder %s246, %s249
      %p255 = scmp.eq.s32.totalorder %s21, 0
      %p256 = por %p254, %p255
      %p257 = scmp.ne.s32.totalorder %s246, %s249
      %p258 = scmp.eq.s32.totalorder %s26, 2
      %p259 = por %p257, %p258
      %p260 = scmp.ne.s32.totalorder %s249, %s250
      %p261 = scmp.eq.s32.totalorder %s26, 0
      %p262 = por %p260, %p261
      %p263 = scmp.ne.s32.totalorder %s249, %s250
      %p264 = scmp.eq.s32.totalorder %s27, 2
      %p265 = por %p263, %p264
      %p267 = scmp.ne.s32.totalorder %s250, %s266
      %p268 = scmp.eq.s32.totalorder %s27, 0
      %p269 = por %p267, %p268
      %p270 = scmp.le.s32.totalorder 1, %s21
      %p271 = scmp.lt.s32.totalorder %s21, 4
      %p272 = pnand %p270, %p271
      %p273 = pneg %p272
      // Predicated region
      $region9: #{tpu_custom_call.1} parent=5 // pred_check
        _
      $region10: #{tpu_custom_call.1} parent=5 // pred_check_branch
        %275 = sbr.rel (%p272) target = $region12
      $region11: #{tpu_custom_call.1} parent=5 // pred_region
        %s276 = ssub.s32 %s21, 1
        // Predicated region
        $region13: #{tpu_custom_call.1} parent=11 // pred_check
          %p277 = pneg %p68
        $region14: #{tpu_custom_call.1} parent=11 // pred_check_branch
          %279 = sbr.rel (%p277) target = $region16
        $region15: #{tpu_custom_call.1} parent=11 // pred_region
          _
        $region16: #{tpu_custom_call.1} parent=11 // pred_fallthru
          _
        // Predicated region
        $region17: #{tpu_custom_call.1} parent=11 // pred_check
          %p280 = pneg %p89
        $region18: #{tpu_custom_call.1} parent=11 // pred_check_branch
          %282 = sbr.rel (%p280) target = $region20
        $region19: #{tpu_custom_call.1} parent=11 // pred_region
          _
        $region20: #{tpu_custom_call.1} parent=11 // pred_fallthru
          _
        // Predicated region
        $region21: #{tpu_custom_call.1} parent=11 // pred_check
          %p283 = pneg %p110
        $region22: #{tpu_custom_call.1} parent=11 // pred_check_branch
          %285 = sbr.rel (%p283) target = $region24
        $region23: #{tpu_custom_call.1} parent=11 // pred_region
          _
        $region24: #{tpu_custom_call.1} parent=11 // pred_fallthru
          _
        // Predicated region
        $region25: #{tpu_custom_call.1} parent=11 // pred_check
          %p286 = pneg %p131
        $region26: #{tpu_custom_call.1} parent=11 // pred_check_branch
          %288 = sbr.rel (%p286) target = $region28
        $region27: #{tpu_custom_call.1} parent=11 // pred_region
          _
        $region28: #{tpu_custom_call.1} parent=11 // pred_fallthru
          _
        // Predicated region
        $region29: #{tpu_custom_call.1} parent=11 // pred_check
          %p289 = pneg %p152
        $region30: #{tpu_custom_call.1} parent=11 // pred_check_branch
          %291 = sbr.rel (%p289) target = $region32
        $region31: #{tpu_custom_call.1} parent=11 // pred_region
          _
        $region32: #{tpu_custom_call.1} parent=11 // pred_fallthru
          _
        // Predicated region
        $region33: #{tpu_custom_call.1} parent=11 // pred_check
          %p292 = pneg %p173
        $region34: #{tpu_custom_call.1} parent=11 // pred_check_branch
          %294 = sbr.rel (%p292) target = $region36
        $region35: #{tpu_custom_call.1} parent=11 // pred_region
          _
        $region36: #{tpu_custom_call.1} parent=11 // pred_fallthru
          _
        // Predicated region
        $region37: #{tpu_custom_call.1} parent=11 // pred_check
          %p295 = pneg %p194
        $region38: #{tpu_custom_call.1} parent=11 // pred_check_branch
          %297 = sbr.rel (%p295) target = $region40
        $region39: #{tpu_custom_call.1} parent=11 // pred_region
          _
        $region40: #{tpu_custom_call.1} parent=11 // pred_fallthru
          _
        // Predicated region
        $region41: #{tpu_custom_call.1} parent=11 // pred_check
          %p298 = pneg %p215
        $region42: #{tpu_custom_call.1} parent=11 // pred_check_branch
          %300 = sbr.rel (%p298) target = $region44
        $region43: #{tpu_custom_call.1} parent=11 // pred_region
          _
        $region44: #{tpu_custom_call.1} parent=11 // pred_fallthru
          _
        // Predicated region
        $region45: #{tpu_custom_call.1} parent=11 // pred_check
          %p301 = pneg %p236
        $region46: #{tpu_custom_call.1} parent=11 // pred_check_branch
          %303 = sbr.rel (%p301) target = $region48
        $region47: #{tpu_custom_call.1} parent=11 // pred_region
          _
        $region48: #{tpu_custom_call.1} parent=11 // pred_fallthru
          _
      $region12: #{tpu_custom_call.1} parent=5 // pred_fallthru
        _
      %p304 = scmp.lt.s32.totalorder %s21, 3
      // Predicated region
      $region49: #{tpu_custom_call.1} parent=5 // pred_check
        %p305 = pneg %p304
      $region50: #{tpu_custom_call.1} parent=5 // pred_check_branch
        %307 = sbr.rel (%p305) target = $region52
      $region51: #{tpu_custom_call.1} parent=5 // pred_region
        // Predicated region
        $region53: #{tpu_custom_call.1} parent=51 // pred_check
          %p308 = pneg %p41
        $region54: #{tpu_custom_call.1} parent=51 // pred_check_branch
          %310 = sbr.rel (%p308) target = $region56
        $region55: #{tpu_custom_call.1} parent=51 // pred_region
          %p311 = scmp.lt.s32.totalorder %s21, 2
          %s312 = scalar_select %p311, %s21, 2
          %s313 = smul.addr %s312, 2
          %s314 = scalar_lea.vmem %s0, %s313
        $region56: #{tpu_custom_call.1} parent=51 // pred_fallthru
          _
      $region52: #{tpu_custom_call.1} parent=5 // pred_fallthru
        _
      %p315 = scmp.le.s32.totalorder 1, %s21
      %p316 = scmp.lt.s32.totalorder %s21, 4
      %p317 = pnand %p315, %p316
      %p318 = pneg %p317
      // Predicated region
      $region57: #{tpu_custom_call.1} parent=5 // pred_check
        _
      $region58: #{tpu_custom_call.1} parent=5 // pred_check_branch
        %320 = sbr.rel (%p317) target = $region60
      $region59: #{tpu_custom_call.1} parent=5 // pred_region
        %s321 = ssub.s32 %s21, 1
        %p322 = scmp.lt.s32.totalorder %s26, 2
        %s323 = scalar_select %p322, %s26, 2
        %s324 = smul.addr %s323, 2
        %s325 = scalar_lea.vmem %s0, %s324
        %p326 = pneg %p47
        %p327 = pneg %p44
        %p328 = pneg %p68
        %p329 = pneg %p65
        %p330 = pneg %p89
        %p331 = pneg %p86
        %p332 = pneg %p110
        %p333 = pneg %p107
        %p334 = pneg %p131
        %p335 = pneg %p128
        %p336 = pneg %p152
        %p337 = pneg %p149
        %p338 = pneg %p173
        %p339 = pneg %p170
        %p340 = pneg %p194
        %p341 = pneg %p191
        %p342 = pneg %p215
        %p343 = pneg %p212
        %p344 = pneg %p236
        %p345 = pneg %p233
        %p346 = pneg %p262
        %p347 = pneg %p259
        %s348 = sand.u32 %s249, 1
        %s349 = scalar_lea.sflag [#allocation4], %s348
        %s350 = sand.u32 %s249, 1
        %s351 = scalar_lea.vmem [#allocation3], %s350
        %p352 = scmp.lt.s32.totalorder %s26, 2
        %s353 = scalar_select %p352, %s26, 2
        %s354 = smul.addr %s353, 2
        %s355 = scalar_lea.vmem %s0, %s354
        %v356 = vld [vmem:[%s355] sm:$0x3]
        %v357 = vld [vmem:[%s1] sm:$0x3]
        %359 = vset.pattern.permute.xlu0 0
        %360 = vperm.xlu0 %359, %v357
        %v361 = vpop.permute.xlu0 %360
        %v363 = vmul.f32 %v356, %v361
        %v364 = vld [vmem:[%s2] sm:$0x3]
        %366 = vset.pattern.permute.xlu0 0
        %367 = vperm.xlu0 %366, %v364
        %v368 = vpop.permute.xlu0 %367
        %v370 = vadd.f32 %v363, %v368
        %v371 = vld [vmem:[%s3] sm:$0xff]
        %v372 = vld [vmem:[%s3 + $0x8] sm:$0xff]
        %v373 = vld [vmem:[%s3 + $0x10] sm:$0xff]
        %v374 = vld [vmem:[%s3 + $0x18] sm:$0xff]
        %v375 = vld [vmem:[%s3 + $0x20] sm:$0xff]
        %v376 = vld [vmem:[%s3 + $0x28] sm:$0xff]
        %v377 = vld [vmem:[%s3 + $0x30] sm:$0x3]
        %v378 = vld [vmem:[%s6] sm:$0xff]
        %v379 = vld [vmem:[%s6 + $0x8] sm:$0xff]
        %v380 = vld [vmem:[%s6 + $0x10] sm:$0xff]
        %v381 = vld [vmem:[%s6 + $0x18] sm:$0xff]
        %v382 = vld [vmem:[%s6 + $0x20] sm:$0xff]
        %v383 = vld [vmem:[%s6 + $0x28] sm:$0xff]
        %v384 = vld [vmem:[%s6 + $0x30] sm:$0x3]
        %386 = vset.pattern.permute.xlu0 0
        %387 = vperm.xlu0 %386, %v378
        %v388 = vpop.permute.xlu0 %387
        %391 = vset.pattern.permute.xlu0 0
        %392 = vperm.xlu0 %391, %v379
        %v393 = vpop.permute.xlu0 %392
        %396 = vset.pattern.permute.xlu0 0
        %397 = vperm.xlu0 %396, %v380
        %v398 = vpop.permute.xlu0 %397
        %401 = vset.pattern.permute.xlu0 0
        %402 = vperm.xlu0 %401, %v381
        %v403 = vpop.permute.xlu0 %402
        %406 = vset.pattern.permute.xlu0 0
        %407 = vperm.xlu0 %406, %v382
        %v408 = vpop.permute.xlu0 %407
        %411 = vset.pattern.permute.xlu0 0
        %412 = vperm.xlu0 %411, %v383
        %v413 = vpop.permute.xlu0 %412
        %416 = vset.pattern.permute.xlu0 0
        %417 = vperm.xlu0 %416, %v384
        %v418 = vpop.permute.xlu0 %417
        %vm420 = vcmask 15360
        %v422 = vsel %vm420, %v371, 0
        %v425 = vsel %vm420, %v372, 0
        %v428 = vsel %vm420, %v373, 0
        %v431 = vsel %vm420, %v374, 0
        %v434 = vsel %vm420, %v375, 0
        %v437 = vsel %vm420, %v376, 0
        %v440 = vsel %vm420, %v377, 0
        %vm442 = vcmask 1041408
        %v444 = vsel %vm442, %v370, 0
        %446 = vmatprep.subr.mxu0 0.0
        %447 = vmatpush1.msra.mxu0 %v444
        %448 = vmatprep.subr.mxu0 0.0
        %449 = vmatpush1.msra.mxu0 0.0
        %450 = vmatprep.subr.mxu0 0.0
        %451 = vmatpush1.msra.mxu0 0.0
        %452 = vmatprep.subr.mxu0 0.0
        %453 = vmatpush1.msra.mxu0 0.0
        %454 = vmatprep.subr.mxu0 0.0
        %455 = vmatpush1.msra.mxu0 0.0
        %456 = vmatprep.subr.mxu0 0.0
        %457 = vmatpush1.msra.mxu0 0.0
        %458 = vmatprep.subr.mxu0 0.0
        %459 = vmatpush1.msra.mxu0 0.0
        %460 = vmatprep.subr.mxu0 0.0
        %461 = vmatpush1.msra.mxu0 0.0
        %462 = vmatprep.subr.mxu0 0.0
        %463 = vmatpush1.msra.mxu0 0.0
        %464 = vmatprep.subr.mxu0 0.0
        %465 = vmatpush1.msra.mxu0 0.0
        %466 = vmatprep.subr.mxu0 0.0
        %467 = vmatpush1.msra.mxu0 0.0
        %468 = vmatprep.subr.mxu0 0.0
        %469 = vmatpush1.msra.mxu0 0.0
        %470 = vmatprep.subr.mxu0 0.0
        %471 = vmatpush1.msra.mxu0 0.0
        %472 = vmatprep.subr.mxu0 0.0
        %473 = vmatpush1.msra.mxu0 0.0
        %474 = vmatprep.subr.mxu0 0.0
        %475 = vmatpush1.msra.mxu0 0.0
        %476 = vmatprep.subr.mxu0 0.0
        %477 = vmatpush1.msra.mxu0 0.0
        %478 = vmatprep.subr.mxu0 0.0
        %479 = vmatpush1.msra.mxu0 0.0
        %480 = vmatprep.subr.mxu0 0.0
        %481 = vmatpush1.msra.mxu0 0.0
        %482 = vmatprep.subr.mxu0 0.0
        %483 = vmatpush1.msra.mxu0 0.0
        %484 = vmatprep.subr.mxu0 0.0
        %485 = vmatpush1.msra.mxu0 0.0
        %486 = vmatprep.subr.mxu0 0.0
        %487 = vmatpush1.msra.mxu0 0.0
        %488 = vmatprep.subr.mxu0 0.0
        %489 = vmatpush1.msra.mxu0 0.0
        %490 = vmatprep.subr.mxu0 0.0
        %491 = vmatpush1.msra.mxu0 0.0
        %492 = vmatprep.subr.mxu0 0.0
        %493 = vmatpush1.msra.mxu0 0.0
        %494 = vmatprep.subr.mxu0 0.0
        %495 = vmatpush1.msra.mxu0 0.0
        %496 = vmatprep.subr.mxu0 0.0
        %497 = vmatpush1.msra.mxu0 0.0
        %498 = vmatprep.subr.mxu0 0.0
        %499 = vmatpush1.msra.mxu0 0.0
        %500 = vmatprep.subr.mxu0 0.0
        %501 = vmatpush1.msra.mxu0 0.0
        %502 = vmatprep.subr.mxu0 0.0
        %503 = vmatpush1.msra.mxu0 0.0
        %504 = vmatprep.subr.mxu0 0.0
        %505 = vmatpush1.msra.mxu0 0.0
        %506 = vmatprep.subr.mxu0 0.0
        %507 = vmatpush1.msra.mxu0 0.0
        %508 = vmatprep.subr.mxu0 0.0
        %509 = vmatpush1.msra.mxu0 0.0
        %510 = vmatprep.mubr.f32.mxu0 0.0
        %511 = vmatmul.mubr.f32.gmra.mrb[0].mxu0 %v422
        %v512 = vpop.f32.mrb[0].mxu0
        %v513 = vadd.f32 %v388, %v512
        %v514 = vpop.f32.mrb[0].mxu0
        %515 = vmatprep.mubr.f32.mxu0 0.0
        %516 = vmatmul.mubr.f32.gmra.mrb[0].mxu0 %v425
        %v517 = vpop.f32.mrb[0].mxu0
        %v518 = vadd.f32 %v393, %v517
        %v519 = vpop.f32.mrb[0].mxu0
        %520 = vmatprep.mubr.f32.mxu0 0.0
        %521 = vmatmul.mubr.f32.gmra.mrb[0].mxu0 %v428
        %v522 = vpop.f32.mrb[0].mxu0
        %v523 = vadd.f32 %v398, %v522
        %v524 = vpop.f32.mrb[0].mxu0
        %525 = vmatprep.mubr.f32.mxu0 0.0
        %526 = vmatmul.mubr.f32.gmra.mrb[0].mxu0 %v431
        %v527 = vpop.f32.mrb[0].mxu0
        %v528 = vadd.f32 %v403, %v527
        %v529 = vpop.f32.mrb[0].mxu0
        %530 = vmatprep.mubr.f32.mxu0 0.0
        %531 = vmatmul.mubr.f32.gmra.mrb[0].mxu0 %v434
        %v532 = vpop.f32.mrb[0].mxu0
        %v533 = vadd.f32 %v408, %v532
        %v534 = vpop.f32.mrb[0].mxu0
        %535 = vmatprep.mubr.f32.mxu0 0.0
        %536 = vmatmul.mubr.f32.gmra.mrb[0].mxu0 %v437
        %v537 = vpop.f32.mrb[0].mxu0
        %v538 = vadd.f32 %v413, %v537
        %v539 = vpop.f32.mrb[0].mxu0
        %540 = vmatprep.mubr.f32.mxu0 0.0
        %541 = vmatmul.mubr.f32.gmra.mrb[0].mxu0 %v440
        %v542 = vpop.f32.mrb[0].mxu0
        %v543 = vadd.f32 %v418, %v542
        %v544 = vpop.f32.mrb[0].mxu0
        %545 = vdwg.mxu0
        %v546 = vadd.f32 %v513, %v518
        %v547 = vadd.f32 %v546, %v523
        %v548 = vadd.f32 %v547, %v528
        %v549 = vadd.f32 %v548, %v533
        %v550 = vadd.f32 %v549, %v538
        %v551 = vsel %vm442, %v543, 0.0
        %v552 = vadd.f32 %v550, %v551
        %v553 = vrot.slane %v552, 4
        %v554 = vadd.f32 %v552, %v553
        %v555 = vrot.slane %v554, 2
        %v556 = vadd.f32 %v554, %v555
        %v557 = vrot.slane %v556, 1
        %v558 = vadd.f32 %v556, %v557
        %v559 = vmul.f32 %v513, %v513
        %v560 = vmul.f32 %v518, %v518
        %v561 = vmul.f32 %v523, %v523
        %v562 = vmul.f32 %v528, %v528
        %v563 = vmul.f32 %v533, %v533
        %v564 = vmul.f32 %v538, %v538
        %v565 = vmul.f32 %v543, %v543
        %v566 = vadd.f32 %v559, %v560
        %v567 = vadd.f32 %v566, %v561
        %v568 = vadd.f32 %v567, %v562
        %v569 = vadd.f32 %v568, %v563
        %v570 = vadd.f32 %v569, %v564
        %v571 = vsel %vm442, %v565, 0.0
        %v572 = vadd.f32 %v570, %v571
        %v573 = vrot.slane %v572, 4
        %v574 = vadd.f32 %v572, %v573
        %v575 = vrot.slane %v574, 2
        %v576 = vadd.f32 %v574, %v575
        %v577 = vrot.slane %v576, 1
        %v578 = vadd.f32 %v576, %v577
        %v579 = vmul.f32 %v558, 0.02
        %v580 = vmul.f32 %v578, 0.02
        %v581 = vmul.f32 %v579, %v579
        %v582 = vsub.f32 %v580, %v581
        %v583 = vadd.f32 %v582, 1e-05
        %v584 = vrsqrt.pop %v583
        %v585 = vsub.f32 %v513, %v579
        %v586 = vsub.f32 %v518, %v579
        %v587 = vsub.f32 %v523, %v579
        %v588 = vsub.f32 %v528, %v579
        %v589 = vsub.f32 %v533, %v579
        %v590 = vsub.f32 %v538, %v579
        %v591 = vsub.f32 %v543, %v579
        %v592 = vmul.f32 %v585, %v584
        %v593 = vmul.f32 %v586, %v584
        %v594 = vmul.f32 %v587, %v584
        %v595 = vmul.f32 %v588, %v584
        %v596 = vmul.f32 %v589, %v584
        %v597 = vmul.f32 %v590, %v584
        %v598 = vmul.f32 %v591, %v584
        %v599 = vld [vmem:[%s8] sm:$0xff]
        %v600 = vld [vmem:[%s8 + $0x8] sm:$0xff]
        %v601 = vld [vmem:[%s8 + $0x10] sm:$0xff]
        %v602 = vld [vmem:[%s8 + $0x18] sm:$0xff]
        %v603 = vld [vmem:[%s8 + $0x20] sm:$0xff]
        %v604 = vld [vmem:[%s8 + $0x28] sm:$0xff]
        %v605 = vld [vmem:[%s8 + $0x30] sm:$0x3]
        %607 = vset.pattern.permute.xlu0 0
        %608 = vperm.xlu0 %607, %v599
        %v609 = vpop.permute.xlu0 %608
        %612 = vset.pattern.permute.xlu0 0
        %613 = vperm.xlu0 %612, %v600
        %v614 = vpop.permute.xlu0 %613
        %617 = vset.pattern.permute.xlu0 0
        %618 = vperm.xlu0 %617, %v601
        %v619 = vpop.permute.xlu0 %618
        %622 = vset.pattern.permute.xlu0 0
        %623 = vperm.xlu0 %622, %v602
        %v624 = vpop.permute.xlu0 %623
        %627 = vset.pattern.permute.xlu0 0
        %628 = vperm.xlu0 %627, %v603
        %v629 = vpop.permute.xlu0 %628
        %632 = vset.pattern.permute.xlu0 0
        %633 = vperm.xlu0 %632, %v604
        %v634 = vpop.permute.xlu0 %633
        %637 = vset.pattern.permute.xlu0 0
        %638 = vperm.xlu0 %637, %v605
        %v639 = vpop.permute.xlu0 %638
        %v641 = vmul.f32 %v592, %v609
        %v642 = vmul.f32 %v593, %v614
        %v643 = vmul.f32 %v594, %v619
        %v644 = vmul.f32 %v595, %v624
        %v645 = vmul.f32 %v596, %v629
        %v646 = vmul.f32 %v597, %v634
        %v647 = vmul.f32 %v598, %v639
        %v648 = vld [vmem:[%s9] sm:$0xff]
        %v649 = vld [vmem:[%s9 + $0x8] sm:$0xff]
        %v650 = vld [vmem:[%s9 + $0x10] sm:$0xff]
        %v651 = vld [vmem:[%s9 + $0x18] sm:$0xff]
        %v652 = vld [vmem:[%s9 + $0x20] sm:$0xff]
        %v653 = vld [vmem:[%s9 + $0x28] sm:$0xff]
        %v654 = vld [vmem:[%s9 + $0x30] sm:$0x3]
        %656 = vset.pattern.permute.xlu0 0
        %657 = vperm.xlu0 %656, %v648
        %v658 = vpop.permute.xlu0 %657
        %661 = vset.pattern.permute.xlu0 0
        %662 = vperm.xlu0 %661, %v649
        %v663 = vpop.permute.xlu0 %662
        %666 = vset.pattern.permute.xlu0 0
        %667 = vperm.xlu0 %666, %v650
        %v668 = vpop.permute.xlu0 %667
        %671 = vset.pattern.permute.xlu0 0
        %672 = vperm.xlu0 %671, %v651
        %v673 = vpop.permute.xlu0 %672
        %676 = vset.pattern.permute.xlu0 0
        %677 = vperm.xlu0 %676, %v652
        %v678 = vpop.permute.xlu0 %677
        %681 = vset.pattern.permute.xlu0 0
        %682 = vperm.xlu0 %681, %v653
        %v683 = vpop.permute.xlu0 %682
        %686 = vset.pattern.permute.xlu0 0
        %687 = vperm.xlu0 %686, %v654
        %v688 = vpop.permute.xlu0 %687
        %v690 = vadd.f32 %v641, %v658
        %v691 = vadd.f32 %v642, %v663
        %v692 = vadd.f32 %v643, %v668
        %v693 = vadd.f32 %v644, %v673
        %v694 = vadd.f32 %v645, %v678
        %v695 = vadd.f32 %v646, %v683
        %v696 = vadd.f32 %v647, %v688
        %v697 = vtanh.pop %v690
        %v698 = vtanh.pop %v691
        %v699 = vtanh.pop %v692
        %v700 = vtanh.pop %v693
        %v701 = vtanh.pop %v694
        %v702 = vtanh.pop %v695
        %v703 = vtanh.pop %v696
        %v704 = vld [vmem:[%s4] sm:$0xff]
        %v705 = vld [vmem:[%s4 + $0x8] sm:$0xff]
        %v706 = vld [vmem:[%s4 + $0x10] sm:$0xff]
        %v707 = vld [vmem:[%s4 + $0x18] sm:$0xff]
        %v708 = vld [vmem:[%s4 + $0x20] sm:$0xff]
        %v709 = vld [vmem:[%s4 + $0x28] sm:$0xff]
        %v710 = vld [vmem:[%s4 + $0x30] sm:$0x3]
        %s711 = scalar_lea.vmem %s6, 56
        %v712 = vld [vmem:[%s711] sm:$0xff]
        %v713 = vld [vmem:[%s711 + $0x8] sm:$0xff]
        %v714 = vld [vmem:[%s711 + $0x10] sm:$0xff]
        %v715 = vld [vmem:[%s711 + $0x18] sm:$0xff]
        %v716 = vld [vmem:[%s711 + $0x20] sm:$0xff]
        %v717 = vld [vmem:[%s711 + $0x28] sm:$0xff]
        %v718 = vld [vmem:[%s711 + $0x30] sm:$0x3]
        %720 = vset.pattern.permute.xlu0 0
        %721 = vperm.xlu0 %720, %v712
        %v722 = vpop.permute.xlu0 %721
        %725 = vset.pattern.permute.xlu0 0
        %726 = vperm.xlu0 %725, %v713
        %v727 = vpop.permute.xlu0 %726
        %730 = vset.pattern.permute.xlu0 0
        %731 = vperm.xlu0 %730, %v714
        %v732 = vpop.permute.xlu0 %731
        %735 = vset.pattern.permute.xlu0 0
        %736 = vperm.xlu0 %735, %v715
        %v737 = vpop.permute.xlu0 %736
        %740 = vset.pattern.permute.xlu0 0
        %741 = vperm.xlu0 %740, %v716
        %v742 = vpop.permute.xlu0 %741
        %745 = vset.pattern.permute.xlu0 0
        %746 = vperm.xlu0 %745, %v717
        %v747 = vpop.permute.xlu0 %746
        %750 = vset.pattern.permute.xlu0 0
        %751 = vperm.xlu0 %750, %v718
        %v752 = vpop.permute.xlu0 %751
        %vm754 = vcmask 408576
        %v756 = vsel %vm754, %v704, 0
        %v759 = vsel %vm754, %v705, 0
        %v762 = vsel %vm754, %v706, 0
        %v765 = vsel %vm754, %v707, 0
        %v768 = vsel %vm754, %v708, 0
        %v771 = vsel %vm754, %v709, 0
        %v774 = vsel %vm754, %v710, 0
        %v777 = vsel %vm442, %v703, 0
        %779 = vmatprep.subr.mxu0 0.0
        %780 = vmatpush1.msra.mxu0 %v697
        %781 = vmatprep.subr.mxu0 0.0
        %782 = vmatpush1.msra.mxu0 %v698
        %783 = vmatprep.subr.mxu0 0.0
        %784 = vmatpush1.msra.mxu0 %v699
        %785 = vmatprep.subr.mxu0 0.0
        %786 = vmatpush1.msra.mxu0 %v700
        %787 = vmatprep.subr.mxu0 0.0
        %788 = vmatpush1.msra.mxu0 %v701
        %789 = vmatprep.subr.mxu0 0.0
        %790 = vmatpush1.msra.mxu0 %v702
        %791 = vmatprep.subr.mxu0 0.0
        %792 = vmatpush1.msra.mxu0 %v777
        %793 = vmatprep.subr.mxu0 0.0
        %794 = vmatpush1.msra.mxu0 0.0
        %795 = vmatprep.subr.mxu0 0.0
        %796 = vmatpush1.msra.mxu0 0.0
        %797 = vmatprep.subr.mxu0 0.0
        %798 = vmatpush1.msra.mxu0 0.0
        %799 = vmatprep.subr.mxu0 0.0
        %800 = vmatpush1.msra.mxu0 0.0
        %801 = vmatprep.subr.mxu0 0.0
        %802 = vmatpush1.msra.mxu0 0.0
        %803 = vmatprep.subr.mxu0 0.0
        %804 = vmatpush1.msra.mxu0 0.0
        %805 = vmatprep.subr.mxu0 0.0
        %806 = vmatpush1.msra.mxu0 0.0
        %807 = vmatprep.subr.mxu0 0.0
        %808 = vmatpush1.msra.mxu0 0.0
        %809 = vmatprep.subr.mxu0 0.0
        %810 = vmatpush1.msra.mxu0 0.0
        %811 = vmatprep.subr.mxu0 0.0
        %812 = vmatpush1.msra.mxu0 0.0
        %813 = vmatprep.subr.mxu0 0.0
        %814 = vmatpush1.msra.mxu0 0.0
        %815 = vmatprep.subr.mxu0 0.0
        %816 = vmatpush1.msra.mxu0 0.0
        %817 = vmatprep.subr.mxu0 0.0
        %818 = vmatpush1.msra.mxu0 0.0
        %819 = vmatprep.subr.mxu0 0.0
        %820 = vmatpush1.msra.mxu0 0.0
        %821 = vmatprep.subr.mxu0 0.0
        %822 = vmatpush1.msra.mxu0 0.0
        %823 = vmatprep.subr.mxu0 0.0
        %824 = vmatpush1.msra.mxu0 0.0
        %825 = vmatprep.subr.mxu0 0.0
        %826 = vmatpush1.msra.mxu0 0.0
        %827 = vmatprep.subr.mxu0 0.0
        %828 = vmatpush1.msra.mxu0 0.0
        %829 = vmatprep.subr.mxu0 0.0
        %830 = vmatpush1.msra.mxu0 0.0
        %831 = vmatprep.subr.mxu0 0.0
        %832 = vmatpush1.msra.mxu0 0.0
        %833 = vmatprep.subr.mxu0 0.0
        %834 = vmatpush1.msra.mxu0 0.0
        %835 = vmatprep.subr.mxu0 0.0
        %836 = vmatpush1.msra.mxu0 0.0
        %837 = vmatprep.subr.mxu0 0.0
        %838 = vmatpush1.msra.mxu0 0.0
        %839 = vmatprep.subr.mxu0 0.0
        %840 = vmatpush1.msra.mxu0 0.0
        %841 = vmatprep.subr.mxu0 0.0
        %842 = vmatpush1.msra.mxu0 0.0
        %843 = vmatprep.mubr.f32.mxu0 0.0
        %844 = vmatmul.mubr.f32.gmra.mrb[0].mxu0 %v756
        %v845 = vpop.f32.mrb[0].mxu0
        %v846 = vadd.f32 %v722, %v845
        %v847 = vpop.f32.mrb[0].mxu0
        %848 = vmatprep.mubr.f32.mxu0 0.0
        %849 = vmatmul.mubr.f32.gmra.mrb[0].mxu0 %v759
        %v850 = vpop.f32.mrb[0].mxu0
        %v851 = vadd.f32 %v727, %v850
        %v852 = vpop.f32.mrb[0].mxu0
        %853 = vmatprep.mubr.f32.mxu0 0.0
        %854 = vmatmul.mubr.f32.gmra.mrb[0].mxu0 %v762
        %v855 = vpop.f32.mrb[0].mxu0
        %v856 = vadd.f32 %v732, %v855
        %v857 = vpop.f32.mrb[0].mxu0
        %858 = vmatprep.mubr.f32.mxu0 0.0
        %859 = vmatmul.mubr.f32.gmra.mrb[0].mxu0 %v765
        %v860 = vpop.f32.mrb[0].mxu0
        %v861 = vadd.f32 %v737, %v860
        %v862 = vpop.f32.mrb[0].mxu0
        %863 = vmatprep.mubr.f32.mxu0 0.0
        %864 = vmatmul.mubr.f32.gmra.mrb[0].mxu0 %v768
        %v865 = vpop.f32.mrb[0].mxu0
        %v866 = vadd.f32 %v742, %v865
        %v867 = vpop.f32.mrb[0].mxu0
        %868 = vmatprep.mubr.f32.mxu0 0.0
        %869 = vmatmul.mubr.f32.gmra.mrb[0].mxu0 %v771
        %v870 = vpop.f32.mrb[0].mxu0
        %v871 = vadd.f32 %v747, %v870
        %v872 = vpop.f32.mrb[0].mxu0
        %873 = vmatprep.mubr.f32.mxu0 0.0
        %874 = vmatmul.mubr.f32.gmra.mrb[0].mxu0 %v774
        %v875 = vpop.f32.mrb[0].mxu0
        %v876 = vadd.f32 %v752, %v875
        %v877 = vpop.f32.mrb[0].mxu0
        %878 = vdwg.mxu0
        %v879 = vadd.f32 %v846, %v851
        %v880 = vadd.f32 %v879, %v856
        %v881 = vadd.f32 %v880, %v861
        %v882 = vadd.f32 %v881, %v866
        %v883 = vadd.f32 %v882, %v871
        %v884 = vsel %vm442, %v876, 0.0
        %v885 = vadd.f32 %v883, %v884
        %v886 = vrot.slane %v885, 4
        %v887 = vadd.f32 %v885, %v886
        %v888 = vrot.slane %v887, 2
        %v889 = vadd.f32 %v887, %v888
        %v890 = vrot.slane %v889, 1
        %v891 = vadd.f32 %v889, %v890
        %v892 = vmul.f32 %v846, %v846
        %v893 = vmul.f32 %v851, %v851
        %v894 = vmul.f32 %v856, %v856
        %v895 = vmul.f32 %v861, %v861
        %v896 = vmul.f32 %v866, %v866
        %v897 = vmul.f32 %v871, %v871
        %v898 = vmul.f32 %v876, %v876
        %v899 = vadd.f32 %v892, %v893
        %v900 = vadd.f32 %v899, %v894
        %v901 = vadd.f32 %v900, %v895
        %v902 = vadd.f32 %v901, %v896
        %v903 = vadd.f32 %v902, %v897
        %v904 = vsel %vm442, %v898, 0.0
        %v905 = vadd.f32 %v903, %v904
        %v906 = vrot.slane %v905, 4
        %v907 = vadd.f32 %v905, %v906
        %v908 = vrot.slane %v907, 2
        %v909 = vadd.f32 %v907, %v908
        %v910 = vrot.slane %v909, 1
        %v911 = vadd.f32 %v909, %v910
        %v912 = vmul.f32 %v891, 0.02
        %v913 = vmul.f32 %v911, 0.02
        %v914 = vmul.f32 %v912, %v912
        %v915 = vsub.f32 %v913, %v914
        %v916 = vadd.f32 %v915, 1e-05
        %v917 = vrsqrt.pop %v916
        %v918 = vsub.f32 %v846, %v912
        %v919 = vsub.f32 %v851, %v912
        %v920 = vsub.f32 %v856, %v912
        %v921 = vsub.f32 %v861, %v912
        %v922 = vsub.f32 %v866, %v912
        %v923 = vsub.f32 %v871, %v912
        %v924 = vsub.f32 %v876, %v912
        %v925 = vmul.f32 %v918, %v917
        %v926 = vmul.f32 %v919, %v917
        %v927 = vmul.f32 %v920, %v917
        %v928 = vmul.f32 %v921, %v917
        %v929 = vmul.f32 %v922, %v917
        %v930 = vmul.f32 %v923, %v917
        %v931 = vmul.f32 %v924, %v917
        %s932 = scalar_lea.vmem %s8, 56
        %v933 = vld [vmem:[%s932] sm:$0xff]
        %v934 = vld [vmem:[%s932 + $0x8] sm:$0xff]
        %v935 = vld [vmem:[%s932 + $0x10] sm:$0xff]
        %v936 = vld [vmem:[%s932 + $0x18] sm:$0xff]
        %v937 = vld [vmem:[%s932 + $0x20] sm:$0xff]
        %v938 = vld [vmem:[%s932 + $0x28] sm:$0xff]
        %v939 = vld [vmem:[%s932 + $0x30] sm:$0x3]
        %941 = vset.pattern.permute.xlu0 0
        %942 = vperm.xlu0 %941, %v933
        %v943 = vpop.permute.xlu0 %942
        %946 = vset.pattern.permute.xlu0 0
        %947 = vperm.xlu0 %946, %v934
        %v948 = vpop.permute.xlu0 %947
        %951 = vset.pattern.permute.xlu0 0
        %952 = vperm.xlu0 %951, %v935
        %v953 = vpop.permute.xlu0 %952
        %956 = vset.pattern.permute.xlu0 0
        %957 = vperm.xlu0 %956, %v936
        %v958 = vpop.permute.xlu0 %957
        %961 = vset.pattern.permute.xlu0 0
        %962 = vperm.xlu0 %961, %v937
        %v963 = vpop.permute.xlu0 %962
        %966 = vset.pattern.permute.xlu0 0
        %967 = vperm.xlu0 %966, %v938
        %v968 = vpop.permute.xlu0 %967
        %971 = vset.pattern.permute.xlu0 0
        %972 = vperm.xlu0 %971, %v939
        %v973 = vpop.permute.xlu0 %972
        %v975 = vmul.f32 %v925, %v943
        %v976 = vmul.f32 %v926, %v948
        %v977 = vmul.f32 %v927, %v953
        %v978 = vmul.f32 %v928, %v958
        %v979 = vmul.f32 %v929, %v963
        %v980 = vmul.f32 %v930, %v968
        %v981 = vmul.f32 %v931, %v973
        %s982 = scalar_lea.vmem %s9, 56
        %v983 = vld [vmem:[%s982] sm:$0xff]
        %v984 = vld [vmem:[%s982 + $0x8] sm:$0xff]
        %v985 = vld [vmem:[%s982 + $0x10] sm:$0xff]
        %v986 = vld [vmem:[%s982 + $0x18] sm:$0xff]
        %v987 = vld [vmem:[%s982 + $0x20] sm:$0xff]
        %v988 = vld [vmem:[%s982 + $0x28] sm:$0xff]
        %v989 = vld [vmem:[%s982 + $0x30] sm:$0x3]
        %991 = vset.pattern.permute.xlu0 0
        %992 = vperm.xlu0 %991, %v983
        %v993 = vpop.permute.xlu0 %992
        %996 = vset.pattern.permute.xlu0 0
        %997 = vperm.xlu0 %996, %v984
        %v998 = vpop.permute.xlu0 %997
        %1001 = vset.pattern.permute.xlu0 0
        %1002 = vperm.xlu0 %1001, %v985
        %v1003 = vpop.permute.xlu0 %1002
        %1006 = vset.pattern.permute.xlu0 0
        %1007 = vperm.xlu0 %1006, %v986
        %v1008 = vpop.permute.xlu0 %1007
        %1011 = vset.pattern.permute.xlu0 0
        %1012 = vperm.xlu0 %1011, %v987
        %v1013 = vpop.permute.xlu0 %1012
        %1016 = vset.pattern.permute.xlu0 0
        %1017 = vperm.xlu0 %1016, %v988
        %v1018 = vpop.permute.xlu0 %1017
        %1021 = vset.pattern.permute.xlu0 0
        %1022 = vperm.xlu0 %1021, %v989
        %v1023 = vpop.permute.xlu0 %1022
        %v1025 = vadd.f32 %v975, %v993
        %v1026 = vadd.f32 %v976, %v998
        %v1027 = vadd.f32 %v977, %v1003
        %v1028 = vadd.f32 %v978, %v1008
        %v1029 = vadd.f32 %v979, %v1013
        %v1030 = vadd.f32 %v980, %v1018
        %v1031 = vadd.f32 %v981, %v1023
        %v1032 = vtanh.pop %v1025
        %v1033 = vtanh.pop %v1026
        %v1034 = vtanh.pop %v1027
        %v1035 = vtanh.pop %v1028
        %v1036 = vtanh.pop %v1029
        %v1037 = vtanh.pop %v1030
        %v1038 = vtanh.pop %v1031
        %s1039 = scalar_lea.vmem %s4, 56
        %v1040 = vld [vmem:[%s1039] sm:$0xff]
        %v1041 = vld [vmem:[%s1039 + $0x8] sm:$0xff]
        %v1042 = vld [vmem:[%s1039 + $0x10] sm:$0xff]
        %v1043 = vld [vmem:[%s1039 + $0x18] sm:$0xff]
        %v1044 = vld [vmem:[%s1039 + $0x20] sm:$0xff]
        %v1045 = vld [vmem:[%s1039 + $0x28] sm:$0xff]
        %v1046 = vld [vmem:[%s1039 + $0x30] sm:$0x3]
        %s1047 = scalar_lea.vmem %s6, 112
        %v1048 = vld [vmem:[%s1047] sm:$0xff]
        %v1049 = vld [vmem:[%s1047 + $0x8] sm:$0xff]
        %v1050 = vld [vmem:[%s1047 + $0x10] sm:$0xff]
        %v1051 = vld [vmem:[%s1047 + $0x18] sm:$0xff]
        %v1052 = vld [vmem:[%s1047 + $0x20] sm:$0xff]
        %v1053 = vld [vmem:[%s1047 + $0x28] sm:$0xff]
        %v1054 = vld [vmem:[%s1047 + $0x30] sm:$0x3]
        %1056 = vset.pattern.permute.xlu0 0
        %1057 = vperm.xlu0 %1056, %v1048
        %v1058 = vpop.permute.xlu0 %1057
        %1061 = vset.pattern.permute.xlu0 0
        %1062 = vperm.xlu0 %1061, %v1049
        %v1063 = vpop.permute.xlu0 %1062
        %1066 = vset.pattern.permute.xlu0 0
        %1067 = vperm.xlu0 %1066, %v1050
        %v1068 = vpop.permute.xlu0 %1067
        %1071 = vset.pattern.permute.xlu0 0
        %1072 = vperm.xlu0 %1071, %v1051
        %v1073 = vpop.permute.xlu0 %1072
        %1076 = vset.pattern.permute.xlu0 0
        %1077 = vperm.xlu0 %1076, %v1052
        %v1078 = vpop.permute.xlu0 %1077
        %1081 = vset.pattern.permute.xlu0 0
        %1082 = vperm.xlu0 %1081, %v1053
        %v1083 = vpop.permute.xlu0 %1082
        %1086 = vset.pattern.permute.xlu0 0
        %1087 = vperm.xlu0 %1086, %v1054
        %v1088 = vpop.permute.xlu0 %1087
        %v1091 = vsel %vm754, %v1040, 0
        %v1094 = vsel %vm754, %v1041, 0
        %v1097 = vsel %vm754, %v1042, 0
        %v1100 = vsel %vm754, %v1043, 0
        %v1103 = vsel %vm754, %v1044, 0
        %v1106 = vsel %vm754, %v1045, 0
        %v1109 = vsel %vm754, %v1046, 0
        %v1112 = vsel %vm442, %v1038, 0
        %1114 = vmatprep.subr.mxu0 0.0
        %1115 = vmatpush1.msra.mxu0 %v1032
        %1116 = vmatprep.subr.mxu0 0.0
        %1117 = vmatpush1.msra.mxu0 %v1033
        %1118 = vmatprep.subr.mxu0 0.0
        %1119 = vmatpush1.msra.mxu0 %v1034
        %1120 = vmatprep.subr.mxu0 0.0
        %1121 = vmatpush1.msra.mxu0 %v1035
        %1122 = vmatprep.subr.mxu0 0.0
        %1123 = vmatpush1.msra.mxu0 %v1036
        %1124 = vmatprep.subr.mxu0 0.0
        %1125 = vmatpush1.msra.mxu0 %v1037
        %1126 = vmatprep.subr.mxu0 0.0
        %1127 = vmatpush1.msra.mxu0 %v1112
        %1128 = vmatprep.subr.mxu0 0.0
        %1129 = vmatpush1.msra.mxu0 0.0
        %1130 = vmatprep.subr.mxu0 0.0
        %1131 = vmatpush1.msra.mxu0 0.0
        %1132 = vmatprep.subr.mxu0 0.0
        %1133 = vmatpush1.msra.mxu0 0.0
        %1134 = vmatprep.subr.mxu0 0.0
        %1135 = vmatpush1.msra.mxu0 0.0
        %1136 = vmatprep.subr.mxu0 0.0
        %1137 = vmatpush1.msra.mxu0 0.0
        %1138 = vmatprep.subr.mxu0 0.0
        %1139 = vmatpush1.msra.mxu0 0.0
        %1140 = vmatprep.subr.mxu0 0.0
        %1141 = vmatpush1.msra.mxu0 0.0
        %1142 = vmatprep.subr.mxu0 0.0
        %1143 = vmatpush1.msra.mxu0 0.0
        %1144 = vmatprep.subr.mxu0 0.0
        %1145 = vmatpush1.msra.mxu0 0.0
        %1146 = vmatprep.subr.mxu0 0.0
        %1147 = vmatpush1.msra.mxu0 0.0
        %1148 = vmatprep.subr.mxu0 0.0
        %1149 = vmatpush1.msra.mxu0 0.0
        %1150 = vmatprep.subr.mxu0 0.0
        %1151 = vmatpush1.msra.mxu0 0.0
        %1152 = vmatprep.subr.mxu0 0.0
        %1153 = vmatpush1.msra.mxu0 0.0
        %1154 = vmatprep.subr.mxu0 0.0
        %1155 = vmatpush1.msra.mxu0 0.0
        %1156 = vmatprep.subr.mxu0 0.0
        %1157 = vmatpush1.msra.mxu0 0.0
        %1158 = vmatprep.subr.mxu0 0.0
        %1159 = vmatpush1.msra.mxu0 0.0
        %1160 = vmatprep.subr.mxu0 0.0
        %1161 = vmatpush1.msra.mxu0 0.0
        %1162 = vmatprep.subr.mxu0 0.0
        %1163 = vmatpush1.msra.mxu0 0.0
        %1164 = vmatprep.subr.mxu0 0.0
        %1165 = vmatpush1.msra.mxu0 0.0
        %1166 = vmatprep.subr.mxu0 0.0
        %1167 = vmatpush1.msra.mxu0 0.0
        %1168 = vmatprep.subr.mxu0 0.0
        %1169 = vmatpush1.msra.mxu0 0.0
        %1170 = vmatprep.subr.mxu0 0.0
        %1171 = vmatpush1.msra.mxu0 0.0
        %1172 = vmatprep.subr.mxu0 0.0
        %1173 = vmatpush1.msra.mxu0 0.0
        %1174 = vmatprep.subr.mxu0 0.0
        %1175 = vmatpush1.msra.mxu0 0.0
        %1176 = vmatprep.subr.mxu0 0.0
        %1177 = vmatpush1.msra.mxu0 0.0
        %1178 = vmatprep.mubr.f32.mxu0 0.0
        %1179 = vmatmul.mubr.f32.gmra.mrb[0].mxu0 %v1091
        %v1180 = vpop.f32.mrb[0].mxu0
        %v1181 = vadd.f32 %v1058, %v1180
        %v1182 = vpop.f32.mrb[0].mxu0
        %1183 = vmatprep.mubr.f32.mxu0 0.0
        %1184 = vmatmul.mubr.f32.gmra.mrb[0].mxu0 %v1094
        %v1185 = vpop.f32.mrb[0].mxu0
        %v1186 = vadd.f32 %v1063, %v1185
        %v1187 = vpop.f32.mrb[0].mxu0
        %1188 = vmatprep.mubr.f32.mxu0 0.0
        %1189 = vmatmul.mubr.f32.gmra.mrb[0].mxu0 %v1097
        %v1190 = vpop.f32.mrb[0].mxu0
        %v1191 = vadd.f32 %v1068, %v1190
        %v1192 = vpop.f32.mrb[0].mxu0
        %1193 = vmatprep.mubr.f32.mxu0 0.0
        %1194 = vmatmul.mubr.f32.gmra.mrb[0].mxu0 %v1100
        %v1195 = vpop.f32.mrb[0].mxu0
        %v1196 = vadd.f32 %v1073, %v1195
        %v1197 = vpop.f32.mrb[0].mxu0
        %1198 = vmatprep.mubr.f32.mxu0 0.0
        %1199 = vmatmul.mubr.f32.gmra.mrb[0].mxu0 %v1103
        %v1200 = vpop.f32.mrb[0].mxu0
        %v1201 = vadd.f32 %v1078, %v1200
        %v1202 = vpop.f32.mrb[0].mxu0
        %1203 = vmatprep.mubr.f32.mxu0 0.0
        %1204 = vmatmul.mubr.f32.gmra.mrb[0].mxu0 %v1106
        %v1205 = vpop.f32.mrb[0].mxu0
        %v1206 = vadd.f32 %v1083, %v1205
        %v1207 = vpop.f32.mrb[0].mxu0
        %1208 = vmatprep.mubr.f32.mxu0 0.0
        %1209 = vmatmul.mubr.f32.gmra.mrb[0].mxu0 %v1109
        %v1210 = vpop.f32.mrb[0].mxu0
        %v1211 = vadd.f32 %v1088, %v1210
        %v1212 = vpop.f32.mrb[0].mxu0
        %1213 = vdwg.mxu0
        %v1214 = vadd.f32 %v1181, %v1186
        %v1215 = vadd.f32 %v1214, %v1191
        %v1216 = vadd.f32 %v1215, %v1196
        %v1217 = vadd.f32 %v1216, %v1201
        %v1218 = vadd.f32 %v1217, %v1206
        %v1219 = vsel %vm442, %v1211, 0.0
        %v1220 = vadd.f32 %v1218, %v1219
        %v1221 = vrot.slane %v1220, 4
        %v1222 = vadd.f32 %v1220, %v1221
        %v1223 = vrot.slane %v1222, 2
        %v1224 = vadd.f32 %v1222, %v1223
        %v1225 = vrot.slane %v1224, 1
        %v1226 = vadd.f32 %v1224, %v1225
        %v1227 = vmul.f32 %v1181, %v1181
        %v1228 = vmul.f32 %v1186, %v1186
        %v1229 = vmul.f32 %v1191, %v1191
        %v1230 = vmul.f32 %v1196, %v1196
        %v1231 = vmul.f32 %v1201, %v1201
        %v1232 = vmul.f32 %v1206, %v1206
        %v1233 = vmul.f32 %v1211, %v1211
        %v1234 = vadd.f32 %v1227, %v1228
        %v1235 = vadd.f32 %v1234, %v1229
        %v1236 = vadd.f32 %v1235, %v1230
        %v1237 = vadd.f32 %v1236, %v1231
        %v1238 = vadd.f32 %v1237, %v1232
        %v1239 = vsel %vm442, %v1233, 0.0
        %v1240 = vadd.f32 %v1238, %v1239
        %v1241 = vrot.slane %v1240, 4
        %v1242 = vadd.f32 %v1240, %v1241
        %v1243 = vrot.slane %v1242, 2
        %v1244 = vadd.f32 %v1242, %v1243
        %v1245 = vrot.slane %v1244, 1
        %v1246 = vadd.f32 %v1244, %v1245
        %v1247 = vmul.f32 %v1226, 0.02
        %v1248 = vmul.f32 %v1246, 0.02
        %v1249 = vmul.f32 %v1247, %v1247
        %v1250 = vsub.f32 %v1248, %v1249
        %v1251 = vadd.f32 %v1250, 1e-05
        %v1252 = vrsqrt.pop %v1251
        %v1253 = vsub.f32 %v1181, %v1247
        %v1254 = vsub.f32 %v1186, %v1247
        %v1255 = vsub.f32 %v1191, %v1247
        %v1256 = vsub.f32 %v1196, %v1247
        %v1257 = vsub.f32 %v1201, %v1247
        %v1258 = vsub.f32 %v1206, %v1247
        %v1259 = vsub.f32 %v1211, %v1247
        %v1260 = vmul.f32 %v1253, %v1252
        %v1261 = vmul.f32 %v1254, %v1252
        %v1262 = vmul.f32 %v1255, %v1252
        %v1263 = vmul.f32 %v1256, %v1252
        %v1264 = vmul.f32 %v1257, %v1252
        %v1265 = vmul.f32 %v1258, %v1252
        %v1266 = vmul.f32 %v1259, %v1252
        %s1267 = scalar_lea.vmem %s8, 112
        %v1268 = vld [vmem:[%s1267] sm:$0xff]
        %v1269 = vld [vmem:[%s1267 + $0x8] sm:$0xff]
        %v1270 = vld [vmem:[%s1267 + $0x10] sm:$0xff]
        %v1271 = vld [vmem:[%s1267 + $0x18] sm:$0xff]
        %v1272 = vld [vmem:[%s1267 + $0x20] sm:$0xff]
        %v1273 = vld [vmem:[%s1267 + $0x28] sm:$0xff]
        %v1274 = vld [vmem:[%s1267 + $0x30] sm:$0x3]
        %1276 = vset.pattern.permute.xlu0 0
        %1277 = vperm.xlu0 %1276, %v1268
        %v1278 = vpop.permute.xlu0 %1277
        %1281 = vset.pattern.permute.xlu0 0
        %1282 = vperm.xlu0 %1281, %v1269
        %v1283 = vpop.permute.xlu0 %1282
        %1286 = vset.pattern.permute.xlu0 0
        %1287 = vperm.xlu0 %1286, %v1270
        %v1288 = vpop.permute.xlu0 %1287
        %1291 = vset.pattern.permute.xlu0 0
        %1292 = vperm.xlu0 %1291, %v1271
        %v1293 = vpop.permute.xlu0 %1292
        %1296 = vset.pattern.permute.xlu0 0
        %1297 = vperm.xlu0 %1296, %v1272
        %v1298 = vpop.permute.xlu0 %1297
        %1301 = vset.pattern.permute.xlu0 0
        %1302 = vperm.xlu0 %1301, %v1273
        %v1303 = vpop.permute.xlu0 %1302
        %1306 = vset.pattern.permute.xlu0 0
        %1307 = vperm.xlu0 %1306, %v1274
        %v1308 = vpop.permute.xlu0 %1307
        %v1310 = vmul.f32 %v1260, %v1278
        %v1311 = vmul.f32 %v1261, %v1283
        %v1312 = vmul.f32 %v1262, %v1288
        %v1313 = vmul.f32 %v1263, %v1293
        %v1314 = vmul.f32 %v1264, %v1298
        %v1315 = vmul.f32 %v1265, %v1303
        %v1316 = vmul.f32 %v1266, %v1308
        %s1317 = scalar_lea.vmem %s9, 112
        %v1318 = vld [vmem:[%s1317] sm:$0xff]
        %v1319 = vld [vmem:[%s1317 + $0x8] sm:$0xff]
        %v1320 = vld [vmem:[%s1317 + $0x10] sm:$0xff]
        %v1321 = vld [vmem:[%s1317 + $0x18] sm:$0xff]
        %v1322 = vld [vmem:[%s1317 + $0x20] sm:$0xff]
        %v1323 = vld [vmem:[%s1317 + $0x28] sm:$0xff]
        %v1324 = vld [vmem:[%s1317 + $0x30] sm:$0x3]
        %1326 = vset.pattern.permute.xlu0 0
        %1327 = vperm.xlu0 %1326, %v1318
        %v1328 = vpop.permute.xlu0 %1327
        %1331 = vset.pattern.permute.xlu0 0
        %1332 = vperm.xlu0 %1331, %v1319
        %v1333 = vpop.permute.xlu0 %1332
        %1336 = vset.pattern.permute.xlu0 0
        %1337 = vperm.xlu0 %1336, %v1320
        %v1338 = vpop.permute.xlu0 %1337
        %1341 = vset.pattern.permute.xlu0 0
        %1342 = vperm.xlu0 %1341, %v1321
        %v1343 = vpop.permute.xlu0 %1342
        %1346 = vset.pattern.permute.xlu0 0
        %1347 = vperm.xlu0 %1346, %v1322
        %v1348 = vpop.permute.xlu0 %1347
        %1351 = vset.pattern.permute.xlu0 0
        %1352 = vperm.xlu0 %1351, %v1323
        %v1353 = vpop.permute.xlu0 %1352
        %1356 = vset.pattern.permute.xlu0 0
        %1357 = vperm.xlu0 %1356, %v1324
        %v1358 = vpop.permute.xlu0 %1357
        %v1360 = vadd.f32 %v1310, %v1328
        %v1361 = vadd.f32 %v1311, %v1333
        %v1362 = vadd.f32 %v1312, %v1338
        %v1363 = vadd.f32 %v1313, %v1343
        %v1364 = vadd.f32 %v1314, %v1348
        %v1365 = vadd.f32 %v1315, %v1353
        %v1366 = vadd.f32 %v1316, %v1358
        %v1367 = vtanh.pop %v1360
        %v1368 = vtanh.pop %v1361
        %v1369 = vtanh.pop %v1362
        %v1370 = vtanh.pop %v1363
        %v1371 = vtanh.pop %v1364
        %v1372 = vtanh.pop %v1365
        %v1373 = vtanh.pop %v1366
        %s1374 = scalar_lea.vmem %s4, 112
        %v1375 = vld [vmem:[%s1374] sm:$0xff]
        %v1376 = vld [vmem:[%s1374 + $0x8] sm:$0xff]
        %v1377 = vld [vmem:[%s1374 + $0x10] sm:$0xff]
        %v1378 = vld [vmem:[%s1374 + $0x18] sm:$0xff]
        %v1379 = vld [vmem:[%s1374 + $0x20] sm:$0xff]
        %v1380 = vld [vmem:[%s1374 + $0x28] sm:$0xff]
        %v1381 = vld [vmem:[%s1374 + $0x30] sm:$0x3]
        %s1382 = scalar_lea.vmem %s6, 168
        %v1383 = vld [vmem:[%s1382] sm:$0xff]
        %v1384 = vld [vmem:[%s1382 + $0x8] sm:$0xff]
        %v1385 = vld [vmem:[%s1382 + $0x10] sm:$0xff]
        %v1386 = vld [vmem:[%s1382 + $0x18] sm:$0xff]
        %v1387 = vld [vmem:[%s1382 + $0x20] sm:$0xff]
        %v1388 = vld [vmem:[%s1382 + $0x28] sm:$0xff]
        %v1389 = vld [vmem:[%s1382 + $0x30] sm:$0x3]
        %1391 = vset.pattern.permute.xlu0 0
        %1392 = vperm.xlu0 %1391, %v1383
        %v1393 = vpop.permute.xlu0 %1392
        %1396 = vset.pattern.permute.xlu0 0
        %1397 = vperm.xlu0 %1396, %v1384
        %v1398 = vpop.permute.xlu0 %1397
        %1401 = vset.pattern.permute.xlu0 0
        %1402 = vperm.xlu0 %1401, %v1385
        %v1403 = vpop.permute.xlu0 %1402
        %1406 = vset.pattern.permute.xlu0 0
        %1407 = vperm.xlu0 %1406, %v1386
        %v1408 = vpop.permute.xlu0 %1407
        %1411 = vset.pattern.permute.xlu0 0
        %1412 = vperm.xlu0 %1411, %v1387
        %v1413 = vpop.permute.xlu0 %1412
        %1416 = vset.pattern.permute.xlu0 0
        %1417 = vperm.xlu0 %1416, %v1388
        %v1418 = vpop.permute.xlu0 %1417
        %1421 = vset.pattern.permute.xlu0 0
        %1422 = vperm.xlu0 %1421, %v1389
        %v1423 = vpop.permute.xlu0 %1422
        %v1426 = vsel %vm754, %v1375, 0
        %v1429 = vsel %vm754, %v1376, 0
        %v1432 = vsel %vm754, %v1377, 0
        %v1435 = vsel %vm754, %v1378, 0
        %v1438 = vsel %vm754, %v1379, 0
        %v1441 = vsel %vm754, %v1380, 0
        %v1444 = vsel %vm754, %v1381, 0
        %v1447 = vsel %vm442, %v1373, 0
        %1449 = vmatprep.subr.mxu0 0.0
        %1450 = vmatpush1.msra.mxu0 %v1367
        %1451 = vmatprep.subr.mxu0 0.0
        %1452 = vmatpush1.msra.mxu0 %v1368
        %1453 = vmatprep.subr.mxu0 0.0
        %1454 = vmatpush1.msra.mxu0 %v1369
        %1455 = vmatprep.subr.mxu0 0.0
        %1456 = vmatpush1.msra.mxu0 %v1370
        %1457 = vmatprep.subr.mxu0 0.0
        %1458 = vmatpush1.msra.mxu0 %v1371
        %1459 = vmatprep.subr.mxu0 0.0
        %1460 = vmatpush1.msra.mxu0 %v1372
        %1461 = vmatprep.subr.mxu0 0.0
        %1462 = vmatpush1.msra.mxu0 %v1447
        %1463 = vmatprep.subr.mxu0 0.0
        %1464 = vmatpush1.msra.mxu0 0.0
        %1465 = vmatprep.subr.mxu0 0.0
        %1466 = vmatpush1.msra.mxu0 0.0
        %1467 = vmatprep.subr.mxu0 0.0
        %1468 = vmatpush1.msra.mxu0 0.0
        %1469 = vmatprep.subr.mxu0 0.0
        %1470 = vmatpush1.msra.mxu0 0.0
        %1471 = vmatprep.subr.mxu0 0.0
        %1472 = vmatpush1.msra.mxu0 0.0
        %1473 = vmatprep.subr.mxu0 0.0
        %1474 = vmatpush1.msra.mxu0 0.0
        %1475 = vmatprep.subr.mxu0 0.0
        %1476 = vmatpush1.msra.mxu0 0.0
        %1477 = vmatprep.subr.mxu0 0.0
        %1478 = vmatpush1.msra.mxu0 0.0
        %1479 = vmatprep.subr.mxu0 0.0
        %1480 = vmatpush1.msra.mxu0 0.0
        %1481 = vmatprep.subr.mxu0 0.0
        %1482 = vmatpush1.msra.mxu0 0.0
        %1483 = vmatprep.subr.mxu0 0.0
        %1484 = vmatpush1.msra.mxu0 0.0
        %1485 = vmatprep.subr.mxu0 0.0
        %1486 = vmatpush1.msra.mxu0 0.0
        %1487 = vmatprep.subr.mxu0 0.0
        %1488 = vmatpush1.msra.mxu0 0.0
        %1489 = vmatprep.subr.mxu0 0.0
        %1490 = vmatpush1.msra.mxu0 0.0
        %1491 = vmatprep.subr.mxu0 0.0
        %1492 = vmatpush1.msra.mxu0 0.0
        %1493 = vmatprep.subr.mxu0 0.0
        %1494 = vmatpush1.msra.mxu0 0.0
        %1495 = vmatprep.subr.mxu0 0.0
        %1496 = vmatpush1.msra.mxu0 0.0
        %1497 = vmatprep.subr.mxu0 0.0
        %1498 = vmatpush1.msra.mxu0 0.0
        %1499 = vmatprep.subr.mxu0 0.0
        %1500 = vmatpush1.msra.mxu0 0.0
        %1501 = vmatprep.subr.mxu0 0.0
        %1502 = vmatpush1.msra.mxu0 0.0
        %1503 = vmatprep.subr.mxu0 0.0
        %1504 = vmatpush1.msra.mxu0 0.0
        %1505 = vmatprep.subr.mxu0 0.0
        %1506 = vmatpush1.msra.mxu0 0.0
        %1507 = vmatprep.subr.mxu0 0.0
        %1508 = vmatpush1.msra.mxu0 0.0
        %1509 = vmatprep.subr.mxu0 0.0
        %1510 = vmatpush1.msra.mxu0 0.0
        %1511 = vmatprep.subr.mxu0 0.0
        %1512 = vmatpush1.msra.mxu0 0.0
        %1513 = vmatprep.mubr.f32.mxu0 0.0
        %1514 = vmatmul.mubr.f32.gmra.mrb[0].mxu0 %v1426
        %v1515 = vpop.f32.mrb[0].mxu0
        %v1516 = vadd.f32 %v1393, %v1515
        %v1517 = vpop.f32.mrb[0].mxu0
        %1518 = vmatprep.mubr.f32.mxu0 0.0
        %1519 = vmatmul.mubr.f32.gmra.mrb[0].mxu0 %v1429
        %v1520 = vpop.f32.mrb[0].mxu0
        %v1521 = vadd.f32 %v1398, %v1520
        %v1522 = vpop.f32.mrb[0].mxu0
        %1523 = vmatprep.mubr.f32.mxu0 0.0
        %1524 = vmatmul.mubr.f32.gmra.mrb[0].mxu0 %v1432
        %v1525 = vpop.f32.mrb[0].mxu0
        %v1526 = vadd.f32 %v1403, %v1525
        %v1527 = vpop.f32.mrb[0].mxu0
        %1528 = vmatprep.mubr.f32.mxu0 0.0
        %1529 = vmatmul.mubr.f32.gmra.mrb[0].mxu0 %v1435
        %v1530 = vpop.f32.mrb[0].mxu0
        %v1531 = vadd.f32 %v1408, %v1530
        %v1532 = vpop.f32.mrb[0].mxu0
        %1533 = vmatprep.mubr.f32.mxu0 0.0
        %1534 = vmatmul.mubr.f32.gmra.mrb[0].mxu0 %v1438
        %v1535 = vpop.f32.mrb[0].mxu0
        %v1536 = vadd.f32 %v1413, %v1535
        %v1537 = vpop.f32.mrb[0].mxu0
        %1538 = vmatprep.mubr.f32.mxu0 0.0
        %1539 = vmatmul.mubr.f32.gmra.mrb[0].mxu0 %v1441
        %v1540 = vpop.f32.mrb[0].mxu0
        %v1541 = vadd.f32 %v1418, %v1540
        %v1542 = vpop.f32.mrb[0].mxu0
        %1543 = vmatprep.mubr.f32.mxu0 0.0
        %1544 = vmatmul.mubr.f32.gmra.mrb[0].mxu0 %v1444
        %v1545 = vpop.f32.mrb[0].mxu0
        %v1546 = vadd.f32 %v1423, %v1545
        %v1547 = vpop.f32.mrb[0].mxu0
        %1548 = vdwg.mxu0
        %v1549 = vadd.f32 %v1516, %v1521
        %v1550 = vadd.f32 %v1549, %v1526
        %v1551 = vadd.f32 %v1550, %v1531
        %v1552 = vadd.f32 %v1551, %v1536
        %v1553 = vadd.f32 %v1552, %v1541
        %v1554 = vsel %vm442, %v1546, 0.0
        %v1555 = vadd.f32 %v1553, %v1554
        %v1556 = vrot.slane %v1555, 4
        %v1557 = vadd.f32 %v1555, %v1556
        %v1558 = vrot.slane %v1557, 2
        %v1559 = vadd.f32 %v1557, %v1558
        %v1560 = vrot.slane %v1559, 1
        %v1561 = vadd.f32 %v1559, %v1560
        %v1562 = vmul.f32 %v1516, %v1516
        %v1563 = vmul.f32 %v1521, %v1521
        %v1564 = vmul.f32 %v1526, %v1526
        %v1565 = vmul.f32 %v1531, %v1531
        %v1566 = vmul.f32 %v1536, %v1536
        %v1567 = vmul.f32 %v1541, %v1541
        %v1568 = vmul.f32 %v1546, %v1546
        %v1569 = vadd.f32 %v1562, %v1563
        %v1570 = vadd.f32 %v1569, %v1564
        %v1571 = vadd.f32 %v1570, %v1565
        %v1572 = vadd.f32 %v1571, %v1566
        %v1573 = vadd.f32 %v1572, %v1567
        %v1574 = vsel %vm442, %v1568, 0.0
        %v1575 = vadd.f32 %v1573, %v1574
        %v1576 = vrot.slane %v1575, 4
        %v1577 = vadd.f32 %v1575, %v1576
        %v1578 = vrot.slane %v1577, 2
        %v1579 = vadd.f32 %v1577, %v1578
        %v1580 = vrot.slane %v1579, 1
        %v1581 = vadd.f32 %v1579, %v1580
        %v1582 = vmul.f32 %v1561, 0.02
        %v1583 = vmul.f32 %v1581, 0.02
        %v1584 = vmul.f32 %v1582, %v1582
        %v1585 = vsub.f32 %v1583, %v1584
        %v1586 = vadd.f32 %v1585, 1e-05
        %v1587 = vrsqrt.pop %v1586
        %v1588 = vsub.f32 %v1516, %v1582
        %v1589 = vsub.f32 %v1521, %v1582
        %v1590 = vsub.f32 %v1526, %v1582
        %v1591 = vsub.f32 %v1531, %v1582
        %v1592 = vsub.f32 %v1536, %v1582
        %v1593 = vsub.f32 %v1541, %v1582
        %v1594 = vsub.f32 %v1546, %v1582
        %v1595 = vmul.f32 %v1588, %v1587
        %v1596 = vmul.f32 %v1589, %v1587
        %v1597 = vmul.f32 %v1590, %v1587
        %v1598 = vmul.f32 %v1591, %v1587
        %v1599 = vmul.f32 %v1592, %v1587
        %v1600 = vmul.f32 %v1593, %v1587
        %v1601 = vmul.f32 %v1594, %v1587
        %s1602 = scalar_lea.vmem %s8, 168
        %v1603 = vld [vmem:[%s1602] sm:$0xff]
        %v1604 = vld [vmem:[%s1602 + $0x8] sm:$0xff]
        %v1605 = vld [vmem:[%s1602 + $0x10] sm:$0xff]
        %v1606 = vld [vmem:[%s1602 + $0x18] sm:$0xff]
        %v1607 = vld [vmem:[%s1602 + $0x20] sm:$0xff]
        %v1608 = vld [vmem:[%s1602 + $0x28] sm:$0xff]
        %v1609 = vld [vmem:[%s1602 + $0x30] sm:$0x3]
        %1611 = vset.pattern.permute.xlu0 0
        %1612 = vperm.xlu0 %1611, %v1603
        %v1613 = vpop.permute.xlu0 %1612
        %1616 = vset.pattern.permute.xlu0 0
        %1617 = vperm.xlu0 %1616, %v1604
        %v1618 = vpop.permute.xlu0 %1617
        %1621 = vset.pattern.permute.xlu0 0
        %1622 = vperm.xlu0 %1621, %v1605
        %v1623 = vpop.permute.xlu0 %1622
        %1626 = vset.pattern.permute.xlu0 0
        %1627 = vperm.xlu0 %1626, %v1606
        %v1628 = vpop.permute.xlu0 %1627
        %1631 = vset.pattern.permute.xlu0 0
        %1632 = vperm.xlu0 %1631, %v1607
        %v1633 = vpop.permute.xlu0 %1632
        %1636 = vset.pattern.permute.xlu0 0
        %1637 = vperm.xlu0 %1636, %v1608
        %v1638 = vpop.permute.xlu0 %1637
        %1641 = vset.pattern.permute.xlu0 0
        %1642 = vperm.xlu0 %1641, %v1609
        %v1643 = vpop.permute.xlu0 %1642
        %v1645 = vmul.f32 %v1595, %v1613
        %v1646 = vmul.f32 %v1596, %v1618
        %v1647 = vmul.f32 %v1597, %v1623
        %v1648 = vmul.f32 %v1598, %v1628
        %v1649 = vmul.f32 %v1599, %v1633
        %v1650 = vmul.f32 %v1600, %v1638
        %v1651 = vmul.f32 %v1601, %v1643
        %s1652 = scalar_lea.vmem %s9, 168
        %v1653 = vld [vmem:[%s1652] sm:$0xff]
        %v1654 = vld [vmem:[%s1652 + $0x8] sm:$0xff]
        %v1655 = vld [vmem:[%s1652 + $0x10] sm:$0xff]
        %v1656 = vld [vmem:[%s1652 + $0x18] sm:$0xff]
        %v1657 = vld [vmem:[%s1652 + $0x20] sm:$0xff]
        %v1658 = vld [vmem:[%s1652 + $0x28] sm:$0xff]
        %v1659 = vld [vmem:[%s1652 + $0x30] sm:$0x3]
        %1661 = vset.pattern.permute.xlu0 0
        %1662 = vperm.xlu0 %1661, %v1653
        %v1663 = vpop.permute.xlu0 %1662
        %1666 = vset.pattern.permute.xlu0 0
        %1667 = vperm.xlu0 %1666, %v1654
        %v1668 = vpop.permute.xlu0 %1667
        %1671 = vset.pattern.permute.xlu0 0
        %1672 = vperm.xlu0 %1671, %v1655
        %v1673 = vpop.permute.xlu0 %1672
        %1676 = vset.pattern.permute.xlu0 0
        %1677 = vperm.xlu0 %1676, %v1656
        %v1678 = vpop.permute.xlu0 %1677
        %1681 = vset.pattern.permute.xlu0 0
        %1682 = vperm.xlu0 %1681, %v1657
        %v1683 = vpop.permute.xlu0 %1682
        %1686 = vset.pattern.permute.xlu0 0
        %1687 = vperm.xlu0 %1686, %v1658
        %v1688 = vpop.permute.xlu0 %1687
        %1691 = vset.pattern.permute.xlu0 0
        %1692 = vperm.xlu0 %1691, %v1659
        %v1693 = vpop.permute.xlu0 %1692
        %v1695 = vadd.f32 %v1645, %v1663
        %v1696 = vadd.f32 %v1646, %v1668
        %v1697 = vadd.f32 %v1647, %v1673
        %v1698 = vadd.f32 %v1648, %v1678
        %v1699 = vadd.f32 %v1649, %v1683
        %v1700 = vadd.f32 %v1650, %v1688
        %v1701 = vadd.f32 %v1651, %v1693
        %v1702 = vtanh.pop %v1695
        %v1703 = vtanh.pop %v1696
        %v1704 = vtanh.pop %v1697
        %v1705 = vtanh.pop %v1698
        %v1706 = vtanh.pop %v1699
        %v1707 = vtanh.pop %v1700
        %v1708 = vtanh.pop %v1701
        %s1709 = scalar_lea.vmem %s4, 168
        %v1710 = vld [vmem:[%s1709] sm:$0xff]
        %v1711 = vld [vmem:[%s1709 + $0x8] sm:$0xff]
        %v1712 = vld [vmem:[%s1709 + $0x10] sm:$0xff]
        %v1713 = vld [vmem:[%s1709 + $0x18] sm:$0xff]
        %v1714 = vld [vmem:[%s1709 + $0x20] sm:$0xff]
        %v1715 = vld [vmem:[%s1709 + $0x28] sm:$0xff]
        %v1716 = vld [vmem:[%s1709 + $0x30] sm:$0x3]
        %s1717 = scalar_lea.vmem %s6, 224
        %v1718 = vld [vmem:[%s1717] sm:$0xff]
        %v1719 = vld [vmem:[%s1717 + $0x8] sm:$0xff]
        %v1720 = vld [vmem:[%s1717 + $0x10] sm:$0xff]
        %v1721 = vld [vmem:[%s1717 + $0x18] sm:$0xff]
        %v1722 = vld [vmem:[%s1717 + $0x20] sm:$0xff]
        %v1723 = vld [vmem:[%s1717 + $0x28] sm:$0xff]
        %v1724 = vld [vmem:[%s1717 + $0x30] sm:$0x3]
        %1726 = vset.pattern.permute.xlu0 0
        %1727 = vperm.xlu0 %1726, %v1718
        %v1728 = vpop.permute.xlu0 %1727
        %1731 = vset.pattern.permute.xlu0 0
        %1732 = vperm.xlu0 %1731, %v1719
        %v1733 = vpop.permute.xlu0 %1732
        %1736 = vset.pattern.permute.xlu0 0
        %1737 = vperm.xlu0 %1736, %v1720
        %v1738 = vpop.permute.xlu0 %1737
        %1741 = vset.pattern.permute.xlu0 0
        %1742 = vperm.xlu0 %1741, %v1721
        %v1743 = vpop.permute.xlu0 %1742
        %1746 = vset.pattern.permute.xlu0 0
        %1747 = vperm.xlu0 %1746, %v1722
        %v1748 = vpop.permute.xlu0 %1747
        %1751 = vset.pattern.permute.xlu0 0
        %1752 = vperm.xlu0 %1751, %v1723
        %v1753 = vpop.permute.xlu0 %1752
        %1756 = vset.pattern.permute.xlu0 0
        %1757 = vperm.xlu0 %1756, %v1724
        %v1758 = vpop.permute.xlu0 %1757
        %v1761 = vsel %vm754, %v1710, 0
        %v1764 = vsel %vm754, %v1711, 0
        %v1767 = vsel %vm754, %v1712, 0
        %v1770 = vsel %vm754, %v1713, 0
        %v1773 = vsel %vm754, %v1714, 0
        %v1776 = vsel %vm754, %v1715, 0
        %v1779 = vsel %vm754, %v1716, 0
        %v1782 = vsel %vm442, %v1708, 0
        %1784 = vmatprep.subr.mxu0 0.0
        %1785 = vmatpush1.msra.mxu0 %v1702
        %1786 = vmatprep.subr.mxu0 0.0
        %1787 = vmatpush1.msra.mxu0 %v1703
        %1788 = vmatprep.subr.mxu0 0.0
        %1789 = vmatpush1.msra.mxu0 %v1704
        %1790 = vmatprep.subr.mxu0 0.0
        %1791 = vmatpush1.msra.mxu0 %v1705
        %1792 = vmatprep.subr.mxu0 0.0
        %1793 = vmatpush1.msra.mxu0 %v1706
        %1794 = vmatprep.subr.mxu0 0.0
        %1795 = vmatpush1.msra.mxu0 %v1707
        %1796 = vmatprep.subr.mxu0 0.0
        %1797 = vmatpush1.msra.mxu0 %v1782
        %1798 = vmatprep.subr.mxu0 0.0
        %1799 = vmatpush1.msra.mxu0 0.0
        %1800 = vmatprep.subr.mxu0 0.0
        %1801 = vmatpush1.msra.mxu0 0.0
        %1802 = vmatprep.subr.mxu0 0.0
        %1803 = vmatpush1.msra.mxu0 0.0
        %1804 = vmatprep.subr.mxu0 0.0
        %1805 = vmatpush1.msra.mxu0 0.0
        %1806 = vmatprep.subr.mxu0 0.0
        %1807 = vmatpush1.msra.mxu0 0.0
        %1808 = vmatprep.subr.mxu0 0.0
        %1809 = vmatpush1.msra.mxu0 0.0
        %1810 = vmatprep.subr.mxu0 0.0
        %1811 = vmatpush1.msra.mxu0 0.0
        %1812 = vmatprep.subr.mxu0 0.0
        %1813 = vmatpush1.msra.mxu0 0.0
        %1814 = vmatprep.subr.mxu0 0.0
        %1815 = vmatpush1.msra.mxu0 0.0
        %1816 = vmatprep.subr.mxu0 0.0
        %1817 = vmatpush1.msra.mxu0 0.0
        %1818 = vmatprep.subr.mxu0 0.0
        %1819 = vmatpush1.msra.mxu0 0.0
        %1820 = vmatprep.subr.mxu0 0.0
        %1821 = vmatpush1.msra.mxu0 0.0
        %1822 = vmatprep.subr.mxu0 0.0
        %1823 = vmatpush1.msra.mxu0 0.0
        %1824 = vmatprep.subr.mxu0 0.0
        %1825 = vmatpush1.msra.mxu0 0.0
        %1826 = vmatprep.subr.mxu0 0.0
        %1827 = vmatpush1.msra.mxu0 0.0
        %1828 = vmatprep.subr.mxu0 0.0
        %1829 = vmatpush1.msra.mxu0 0.0
        %1830 = vmatprep.subr.mxu0 0.0
        %1831 = vmatpush1.msra.mxu0 0.0
        %1832 = vmatprep.subr.mxu0 0.0
        %1833 = vmatpush1.msra.mxu0 0.0
        %1834 = vmatprep.subr.mxu0 0.0
        %1835 = vmatpush1.msra.mxu0 0.0
        %1836 = vmatprep.subr.mxu0 0.0
        %1837 = vmatpush1.msra.mxu0 0.0
        %1838 = vmatprep.subr.mxu0 0.0
        %1839 = vmatpush1.msra.mxu0 0.0
        %1840 = vmatprep.subr.mxu0 0.0
        %1841 = vmatpush1.msra.mxu0 0.0
        %1842 = vmatprep.subr.mxu0 0.0
        %1843 = vmatpush1.msra.mxu0 0.0
        %1844 = vmatprep.subr.mxu0 0.0
        %1845 = vmatpush1.msra.mxu0 0.0
        %1846 = vmatprep.subr.mxu0 0.0
        %1847 = vmatpush1.msra.mxu0 0.0
        %1848 = vmatprep.mubr.f32.mxu0 0.0
        %1849 = vmatmul.mubr.f32.gmra.mrb[0].mxu0 %v1761
        %v1850 = vpop.f32.mrb[0].mxu0
        %v1851 = vadd.f32 %v1728, %v1850
        %v1852 = vpop.f32.mrb[0].mxu0
        %1853 = vmatprep.mubr.f32.mxu0 0.0
        %1854 = vmatmul.mubr.f32.gmra.mrb[0].mxu0 %v1764
        %v1855 = vpop.f32.mrb[0].mxu0
        %v1856 = vadd.f32 %v1733, %v1855
        %v1857 = vpop.f32.mrb[0].mxu0
        %1858 = vmatprep.mubr.f32.mxu0 0.0
        %1859 = vmatmul.mubr.f32.gmra.mrb[0].mxu0 %v1767
        %v1860 = vpop.f32.mrb[0].mxu0
        %v1861 = vadd.f32 %v1738, %v1860
        %v1862 = vpop.f32.mrb[0].mxu0
        %1863 = vmatprep.mubr.f32.mxu0 0.0
        %1864 = vmatmul.mubr.f32.gmra.mrb[0].mxu0 %v1770
        %v1865 = vpop.f32.mrb[0].mxu0
        %v1866 = vadd.f32 %v1743, %v1865
        %v1867 = vpop.f32.mrb[0].mxu0
        %1868 = vmatprep.mubr.f32.mxu0 0.0
        %1869 = vmatmul.mubr.f32.gmra.mrb[0].mxu0 %v1773
        %v1870 = vpop.f32.mrb[0].mxu0
        %v1871 = vadd.f32 %v1748, %v1870
        %v1872 = vpop.f32.mrb[0].mxu0
        %1873 = vmatprep.mubr.f32.mxu0 0.0
        %1874 = vmatmul.mubr.f32.gmra.mrb[0].mxu0 %v1776
        %v1875 = vpop.f32.mrb[0].mxu0
        %v1876 = vadd.f32 %v1753, %v1875
        %v1877 = vpop.f32.mrb[0].mxu0
        %1878 = vmatprep.mubr.f32.mxu0 0.0
        %1879 = vmatmul.mubr.f32.gmra.mrb[0].mxu0 %v1779
        %v1880 = vpop.f32.mrb[0].mxu0
        %v1881 = vadd.f32 %v1758, %v1880
        %v1882 = vpop.f32.mrb[0].mxu0
        %1883 = vdwg.mxu0
        %v1884 = vadd.f32 %v1851, %v1856
        %v1885 = vadd.f32 %v1884, %v1861
        %v1886 = vadd.f32 %v1885, %v1866
        %v1887 = vadd.f32 %v1886, %v1871
        %v1888 = vadd.f32 %v1887, %v1876
        %v1889 = vsel %vm442, %v1881, 0.0
        %v1890 = vadd.f32 %v1888, %v1889
        %v1891 = vrot.slane %v1890, 4
        %v1892 = vadd.f32 %v1890, %v1891
        %v1893 = vrot.slane %v1892, 2
        %v1894 = vadd.f32 %v1892, %v1893
        %v1895 = vrot.slane %v1894, 1
        %v1896 = vadd.f32 %v1894, %v1895
        %v1897 = vmul.f32 %v1851, %v1851
        %v1898 = vmul.f32 %v1856, %v1856
        %v1899 = vmul.f32 %v1861, %v1861
        %v1900 = vmul.f32 %v1866, %v1866
        %v1901 = vmul.f32 %v1871, %v1871
        %v1902 = vmul.f32 %v1876, %v1876
        %v1903 = vmul.f32 %v1881, %v1881
        %v1904 = vadd.f32 %v1897, %v1898
        %v1905 = vadd.f32 %v1904, %v1899
        %v1906 = vadd.f32 %v1905, %v1900
        %v1907 = vadd.f32 %v1906, %v1901
        %v1908 = vadd.f32 %v1907, %v1902
        %v1909 = vsel %vm442, %v1903, 0.0
        %v1910 = vadd.f32 %v1908, %v1909
        %v1911 = vrot.slane %v1910, 4
        %v1912 = vadd.f32 %v1910, %v1911
        %v1913 = vrot.slane %v1912, 2
        %v1914 = vadd.f32 %v1912, %v1913
        %v1915 = vrot.slane %v1914, 1
        %v1916 = vadd.f32 %v1914, %v1915
        %v1917 = vmul.f32 %v1896, 0.02
        %v1918 = vmul.f32 %v1916, 0.02
        %v1919 = vmul.f32 %v1917, %v1917
        %v1920 = vsub.f32 %v1918, %v1919
        %v1921 = vadd.f32 %v1920, 1e-05
        %v1922 = vrsqrt.pop %v1921
        %v1923 = vsub.f32 %v1851, %v1917
        %v1924 = vsub.f32 %v1856, %v1917
        %v1925 = vsub.f32 %v1861, %v1917
        %v1926 = vsub.f32 %v1866, %v1917
        %v1927 = vsub.f32 %v1871, %v1917
        %v1928 = vsub.f32 %v1876, %v1917
        %v1929 = vsub.f32 %v1881, %v1917
        %v1930 = vmul.f32 %v1923, %v1922
        %v1931 = vmul.f32 %v1924, %v1922
        %v1932 = vmul.f32 %v1925, %v1922
        %v1933 = vmul.f32 %v1926, %v1922
        %v1934 = vmul.f32 %v1927, %v1922
        %v1935 = vmul.f32 %v1928, %v1922
        %v1936 = vmul.f32 %v1929, %v1922
        %s1937 = scalar_lea.vmem %s8, 224
        %v1938 = vld [vmem:[%s1937] sm:$0xff]
        %v1939 = vld [vmem:[%s1937 + $0x8] sm:$0xff]
        %v1940 = vld [vmem:[%s1937 + $0x10] sm:$0xff]
        %v1941 = vld [vmem:[%s1937 + $0x18] sm:$0xff]
        %v1942 = vld [vmem:[%s1937 + $0x20] sm:$0xff]
        %v1943 = vld [vmem:[%s1937 + $0x28] sm:$0xff]
        %v1944 = vld [vmem:[%s1937 + $0x30] sm:$0x3]
        %1946 = vset.pattern.permute.xlu0 0
        %1947 = vperm.xlu0 %1946, %v1938
        %v1948 = vpop.permute.xlu0 %1947
        %1951 = vset.pattern.permute.xlu0 0
        %1952 = vperm.xlu0 %1951, %v1939
        %v1953 = vpop.permute.xlu0 %1952
        %1956 = vset.pattern.permute.xlu0 0
        %1957 = vperm.xlu0 %1956, %v1940
        %v1958 = vpop.permute.xlu0 %1957
        %1961 = vset.pattern.permute.xlu0 0
        %1962 = vperm.xlu0 %1961, %v1941
        %v1963 = vpop.permute.xlu0 %1962
        %1966 = vset.pattern.permute.xlu0 0
        %1967 = vperm.xlu0 %1966, %v1942
        %v1968 = vpop.permute.xlu0 %1967
        %1971 = vset.pattern.permute.xlu0 0
        %1972 = vperm.xlu0 %1971, %v1943
        %v1973 = vpop.permute.xlu0 %1972
        %1976 = vset.pattern.permute.xlu0 0
        %1977 = vperm.xlu0 %1976, %v1944
        %v1978 = vpop.permute.xlu0 %1977
        %v1980 = vmul.f32 %v1930, %v1948
        %v1981 = vmul.f32 %v1931, %v1953
        %v1982 = vmul.f32 %v1932, %v1958
        %v1983 = vmul.f32 %v1933, %v1963
        %v1984 = vmul.f32 %v1934, %v1968
        %v1985 = vmul.f32 %v1935, %v1973
        %v1986 = vmul.f32 %v1936, %v1978
        %s1987 = scalar_lea.vmem %s9, 224
        %v1988 = vld [vmem:[%s1987] sm:$0xff]
        %v1989 = vld [vmem:[%s1987 + $0x8] sm:$0xff]
        %v1990 = vld [vmem:[%s1987 + $0x10] sm:$0xff]
        %v1991 = vld [vmem:[%s1987 + $0x18] sm:$0xff]
        %v1992 = vld [vmem:[%s1987 + $0x20] sm:$0xff]
        %v1993 = vld [vmem:[%s1987 + $0x28] sm:$0xff]
        %v1994 = vld [vmem:[%s1987 + $0x30] sm:$0x3]
        %1996 = vset.pattern.permute.xlu0 0
        %1997 = vperm.xlu0 %1996, %v1988
        %v1998 = vpop.permute.xlu0 %1997
        %2001 = vset.pattern.permute.xlu0 0
        %2002 = vperm.xlu0 %2001, %v1989
        %v2003 = vpop.permute.xlu0 %2002
        %2006 = vset.pattern.permute.xlu0 0
        %2007 = vperm.xlu0 %2006, %v1990
        %v2008 = vpop.permute.xlu0 %2007
        %2011 = vset.pattern.permute.xlu0 0
        %2012 = vperm.xlu0 %2011, %v1991
        %v2013 = vpop.permute.xlu0 %2012
        %2016 = vset.pattern.permute.xlu0 0
        %2017 = vperm.xlu0 %2016, %v1992
        %v2018 = vpop.permute.xlu0 %2017
        %2021 = vset.pattern.permute.xlu0 0
        %2022 = vperm.xlu0 %2021, %v1993
        %v2023 = vpop.permute.xlu0 %2022
        %2026 = vset.pattern.permute.xlu0 0
        %2027 = vperm.xlu0 %2026, %v1994
        %v2028 = vpop.permute.xlu0 %2027
        %v2030 = vadd.f32 %v1980, %v1998
        %v2031 = vadd.f32 %v1981, %v2003
        %v2032 = vadd.f32 %v1982, %v2008
        %v2033 = vadd.f32 %v1983, %v2013
        %v2034 = vadd.f32 %v1984, %v2018
        %v2035 = vadd.f32 %v1985, %v2023
        %v2036 = vadd.f32 %v1986, %v2028
        %v2037 = vtanh.pop %v2030
        %v2038 = vtanh.pop %v2031
        %v2039 = vtanh.pop %v2032
        %v2040 = vtanh.pop %v2033
        %v2041 = vtanh.pop %v2034
        %v2042 = vtanh.pop %v2035
        %v2043 = vtanh.pop %v2036
        %v2044 = vld [vmem:[%s5] sm:$0x1]
        %v2045 = vld [vmem:[#allocation2] sm:$0x1]
        %2047 = vset.pattern.permute.xlu0 0
        %2048 = vperm.xlu0 %2047, %v2045
        %v2049 = vpop.permute.xlu0 %2048
        %v2051 = vlaneseq
        %v2052 = vshrl.u32 %v2051, 7
        %v2053 = vsub.s32 0, %v2052
        %v2054 = vrot.slane %v2049, %v2053
        %v2056 = vsel %vm754, %v2044, 0
        %v2059 = vsel %vm442, %v2043, 0
        %2061 = vmatprep.subr.mxu0 0.0
        %2062 = vmatpush1.msra.mxu0 %v2037
        %2063 = vmatprep.subr.mxu0 0.0
        %2064 = vmatpush1.msra.mxu0 %v2038
        %2065 = vmatprep.subr.mxu0 0.0
        %2066 = vmatpush1.msra.mxu0 %v2039
        %2067 = vmatprep.subr.mxu0 0.0
        %2068 = vmatpush1.msra.mxu0 %v2040
        %2069 = vmatprep.subr.mxu0 0.0
        %2070 = vmatpush1.msra.mxu0 %v2041
        %2071 = vmatprep.subr.mxu0 0.0
        %2072 = vmatpush1.msra.mxu0 %v2042
        %2073 = vmatprep.subr.mxu0 0.0
        %2074 = vmatpush1.msra.mxu0 %v2059
        %2075 = vmatprep.subr.mxu0 0.0
        %2076 = vmatpush1.msra.mxu0 0.0
        %2077 = vmatprep.subr.mxu0 0.0
        %2078 = vmatpush1.msra.mxu0 0.0
        %2079 = vmatprep.subr.mxu0 0.0
        %2080 = vmatpush1.msra.mxu0 0.0
        %2081 = vmatprep.subr.mxu0 0.0
        %2082 = vmatpush1.msra.mxu0 0.0
        %2083 = vmatprep.subr.mxu0 0.0
        %2084 = vmatpush1.msra.mxu0 0.0
        %2085 = vmatprep.subr.mxu0 0.0
        %2086 = vmatpush1.msra.mxu0 0.0
        %2087 = vmatprep.subr.mxu0 0.0
        %2088 = vmatpush1.msra.mxu0 0.0
        %2089 = vmatprep.subr.mxu0 0.0
        %2090 = vmatpush1.msra.mxu0 0.0
        %2091 = vmatprep.subr.mxu0 0.0
        %2092 = vmatpush1.msra.mxu0 0.0
        %2093 = vmatprep.subr.mxu0 0.0
        %2094 = vmatpush1.msra.mxu0 0.0
        %2095 = vmatprep.subr.mxu0 0.0
        %2096 = vmatpush1.msra.mxu0 0.0
        %2097 = vmatprep.subr.mxu0 0.0
        %2098 = vmatpush1.msra.mxu0 0.0
        %2099 = vmatprep.subr.mxu0 0.0
        %2100 = vmatpush1.msra.mxu0 0.0
        %2101 = vmatprep.subr.mxu0 0.0
        %2102 = vmatpush1.msra.mxu0 0.0
        %2103 = vmatprep.subr.mxu0 0.0
        %2104 = vmatpush1.msra.mxu0 0.0
        %2105 = vmatprep.subr.mxu0 0.0
        %2106 = vmatpush1.msra.mxu0 0.0
        %2107 = vmatprep.subr.mxu0 0.0
        %2108 = vmatpush1.msra.mxu0 0.0
        %2109 = vmatprep.subr.mxu0 0.0
        %2110 = vmatpush1.msra.mxu0 0.0
        %2111 = vmatprep.subr.mxu0 0.0
        %2112 = vmatpush1.msra.mxu0 0.0
        %2113 = vmatprep.subr.mxu0 0.0
        %2114 = vmatpush1.msra.mxu0 0.0
        %2115 = vmatprep.subr.mxu0 0.0
        %2116 = vmatpush1.msra.mxu0 0.0
        %2117 = vmatprep.subr.mxu0 0.0
        %2118 = vmatpush1.msra.mxu0 0.0
        %2119 = vmatprep.subr.mxu0 0.0
        %2120 = vmatpush1.msra.mxu0 0.0
        %2121 = vmatprep.subr.mxu0 0.0
        %2122 = vmatpush1.msra.mxu0 0.0
        %2123 = vmatprep.subr.mxu0 0.0
        %2124 = vmatpush1.msra.mxu0 0.0
        %2125 = vmatprep.mubr.f32.mxu0 0.0
        %2126 = vmatmul.mubr.f32.gmra.mrb[0].mxu0 %v2056
        %v2127 = vpop.f32.mrb[0].mxu0
        %v2128 = vadd.f32 %v2054, %v2127
        %v2129 = vpop.f32.mrb[0].mxu0
        %2130 = vdwg.mxu0
        %2131 = vst [vmem:[%s351] sm:$0x1] %v2128
        %s2132 = sand.u32 %s249, 1
        %s2133 = scalar_lea.sflag [#allocation4], %s2132
        %s2134 = sand.u32 %s249, 1
        %s2135 = scalar_lea.vmem [#allocation3], %s2134
        // Predicated region
        $region61: #{tpu_custom_call.1} parent=59 // pred_check
          %p2136 = pneg %p259
        $region62: #{tpu_custom_call.1} parent=59 // pred_check_branch
          %2138 = sbr.rel (%p2136) target = $region64
        $region63: #{tpu_custom_call.1} parent=59 // pred_region
          %s2140 = ssub.s32 16, 16
          %2141 = vsyncadd %s2133, %s2140
          %s2142 = smul.addr %s26, 16
          %s2143 = scalar_lea.hbm %s10, %s2142
          %s2145 = sshll.u32 %s2135, 4
          %s2146 = int_to_ptr.vmem [resolvable:$true] %s2145
          %2148 = dma.vmem_to_hbm [thread:$0]  %s2146, 16, %s2143, %s2133
        $region64: #{tpu_custom_call.1} parent=59 // pred_fallthru
          _
      $region60: #{tpu_custom_call.1} parent=5 // pred_fallthru
        _
      %p2149 = scmp.le.s32.totalorder 2, %s21
      // Predicated region
      $region65: #{tpu_custom_call.1} parent=5 // pred_check
        %p2150 = pneg %p2149
      $region66: #{tpu_custom_call.1} parent=5 // pred_check_branch
        %2152 = sbr.rel (%p2150) target = $region68
      $region67: #{tpu_custom_call.1} parent=5 // pred_region
        %s2153 = ssub.s32 %s21, 2
        // Predicated region
        $region69: #{tpu_custom_call.1} parent=67 // pred_check
          %p2154 = pneg %p265
        $region70: #{tpu_custom_call.1} parent=67 // pred_check_branch
          %2156 = sbr.rel (%p2154) target = $region72
        $region71: #{tpu_custom_call.1} parent=67 // pred_region
          %s2157 = sand.u32 %s250, 1
          %s2158 = scalar_lea.sflag [#allocation4], %s2157
          %s2159 = sand.u32 %s250, 1
          %s2160 = scalar_lea.vmem [#allocation3], %s2159
          %2161 = dma.done %s2158, 16
        $region72: #{tpu_custom_call.1} parent=67 // pred_fallthru
          _
      $region68: #{tpu_custom_call.1} parent=5 // pred_fallthru
        _
    $region6: #{tpu_custom_call.1} parent=1 // loop_footer
      %s25 = sadd.s32 1, %s21
    $region7: #{tpu_custom_call.1} parent=1 // loop_footer_branch
      %20 = sbr.rel target = $region3
    $region8: #{tpu_custom_call.1} parent=1 // loop_exit
      _
    %2162 = vsyncpa [#allocation4], 1
    %s2163 = scalar_lea.sflag [#allocation4], 1
    %2164 = vsyncpa %s2163, 1

</llo_original>
